<compile_context>
chip_gen: v5e
topology: v5e:2x2
jax: 0.10.0
libtpu: 0.0.40
codegen_flags: <defaults>
</compile_context>

<pallas_src>
import functools

import jax
import jax.numpy as jnp
from jax import lax
from jax.experimental import pallas as pl
from jax.experimental.pallas import tpu as pltpu


# --------------------------------------------------------------------------- #
# Kernel
# --------------------------------------------------------------------------- #
def _grouped_shift_conv_kernel(x_ref, w_ref, o_ref, *, width, shift):
    """One grid step: B (batch, group) slabs, NCHW-native.

    x_ref : (B, Cg, H*W)  raw input slabs (spatial dims flattened on lanes).
    w_ref : (3, Cg, Cg)   w_ref[k, i, j] = weight[j, k, i]  (i out-ch, j in-ch).
    o_ref : (B, Cg, H*W)  output slabs, same layout/dtype as the caller's x.
    """
    B, Cg, HW = o_ref.shape
    W = width
    cd = w_ref.dtype

    # In-kernel boundary predicates (cheap VPU iota, replaces HBM-resident
    # masks).  Built once, reused for every slab in this step.
    col = lax.broadcasted_iota(jnp.int32, (1, HW), 1) % W
    wrap_col = 0 if shift > 0 else W - 1
    p_wrap = col == wrap_col          # the one column whose circular-W read wraps
    p_left = col >= 1                 # tap k=0 valid columns (zero pad at w=0)
    p_right = col <= W - 2            # tap k=2 valid columns (zero pad at w=W-1)
    zero = jnp.zeros((), cd)

    w0 = w_ref[0]
    w1 = w_ref[1]
    w2 = w_ref[2]

    for b in range(B):
        xb = x_ref[b].astype(cd)                                    # (Cg, HW)

        # Fused circular H-roll and circular W-roll (both by `shift`): a flat
        # lane roll by shift*(W+1) is correct everywhere except the one column
        # per row whose W-read wraps; there the flat roll by `shift` is correct.
        xc = jnp.where(p_wrap,
                       jnp.roll(xb, shift, axis=-1),
                       jnp.roll(xb, shift * (W + 1), axis=-1))

        # Outer conv taps: flat +-1 lane shifts of xc.  The boundary select
        # zeroes exactly the row-crossing reads == the conv's zero padding.
        y0 = jnp.where(p_left, jnp.roll(xc, 1, axis=-1), zero)       # tap k=0
        y2 = jnp.where(p_right, jnp.roll(xc, -1, axis=-1), zero)     # tap k=2

        acc = jnp.dot(w1, xc, preferred_element_type=jnp.float32)    # k=1
        acc += jnp.dot(w0, y0, preferred_element_type=jnp.float32)   # k=0
        acc += jnp.dot(w2, y2, preferred_element_type=jnp.float32)   # k=2

        o_ref[b] = acc.astype(o_ref.dtype)   # final dtype written directly


# --------------------------------------------------------------------------- #
# Block-size / VMEM selection
# --------------------------------------------------------------------------- #
def _select_slabs_and_vmem(N, Cg, HW, in_isz, out_isz, cd_isz, n_groups):
    """Pick slabs-per-step B (divisor of N, <=16) and the scoped-VMEM limit."""
    try:
        cap = int(pltpu.get_tpu_info().vmem_capacity_bytes)
    except Exception:
        cap = 64 * 1024 * 1024            # conservative fallback (v7x: 64 MiB)
    vmem_limit = max(32 << 20, min((3 * cap) // 4, 100 << 20))
    budget = (4 * vmem_limit) // 5        # headroom for compiler scratch

    hw_pad = -(-HW // 128) * 128          # lane padding inside VMEM
    cg_pad = -(-Cg // 8) * 8
    cg_lane = -(-Cg // 128) * 128
    slab_in = cg_pad * hw_pad * in_isz
    slab_out = cg_pad * hw_pad * out_isz
    slab_cd = cg_pad * hw_pad * cd_isz
    w_bytes = 3 * cg_pad * cg_lane * cd_isz

    def footprint(b):
        # double-buffered input + output blocks, weights (2 bufs, counted once
        # per buffer only), per-slab in-kernel temporaries (rolls/selects) and
        # the f32 accumulator.
        return (2 * b * slab_in + 2 * b * slab_out + 2 * w_bytes
                + 6 * slab_cd + 2 * cg_pad * hw_pad * 4)

    divisors = [b for b in range(1, N + 1) if N % b == 0 and b <= 16]
    feasible = [b for b in divisors if footprint(b) <= budget] or [1]
    # Prefer an even total grid-step count so both v7x TensorCores stay busy.
    even = [b for b in feasible if ((N // b) * n_groups) % 2 == 0]
    B = max(even) if even else max(feasible)
    return B, int(vmem_limit)


# --------------------------------------------------------------------------- #
# Wrapper
# --------------------------------------------------------------------------- #
def grouped_shift_conv(x_nchw, weight, *, groups=2, shift=1,
                       compute_dtype=jnp.bfloat16):
    """x_nchw: (N, G*Cg, H, W); weight: (Cg, 3, Cg) -> (N, G*Cg, H, W)."""
    N, C, H, W = x_nchw.shape
    G = groups
    Cg = C // G
    assert C == G * Cg and weight.shape == (Cg, 3, Cg)
    assert shift in (1, -1)
    HW = H * W
    out_dtype = x_nchw.dtype

    # Free, layout-preserving reshape: NCHW stays NCHW, spatial dims flattened
    # so each (batch, group) slab is (Cg, H*W) with H*W on the lane dim.
    x3 = x_nchw.reshape(N, C, HW)

    # weight[j, k, i] -> wk[k, i, j]: contiguous per-tap (Cg_out, Cg_in) tiles
    # for the NCHW-native w^T @ x orientation.
    wk = jnp.transpose(weight, (1, 2, 0)).astype(compute_dtype)

    cd_isz = jnp.dtype(compute_dtype).itemsize
    B, vmem_limit = _select_slabs_and_vmem(
        N, Cg, HW, jnp.dtype(x_nchw.dtype).itemsize,
        jnp.dtype(out_dtype).itemsize, cd_isz, G)

    kernel = functools.partial(_grouped_shift_conv_kernel, width=W, shift=shift)
    out3 = pl.pallas_call(
        kernel,
        out_shape=jax.ShapeDtypeStruct((N, C, HW), out_dtype),
        grid=(N // B, G),
        in_specs=[
            pl.BlockSpec((B, Cg, HW), lambda i, g: (i, g, 0)),
            pl.BlockSpec((3, Cg, Cg), lambda i, g: (0, 0, 0)),
        ],
        out_specs=pl.BlockSpec((B, Cg, HW), lambda i, g: (i, g, 0)),
        compiler_params=pltpu.CompilerParams(
            dimension_semantics=("parallel", "parallel"),
            vmem_limit_bytes=vmem_limit),
    )(x3, wk)

    return out3.reshape(N, C, H, W)   # free reshape, no extra HBM pass


# --------------------------------------------------------------------------- #
# Pure-JAX reference (direct translation of the torch forward)
# --------------------------------------------------------------------------- #
def reference(x_nchw, weight, *, groups=2, shift=1):
    N, C, H, W = x_nchw.shape
    G = groups
    Cg = C // G
    t = x_nchw.reshape(N, G, Cg, H, W)
    t = jnp.roll(t, shift, axis=4)
    tp = jnp.pad(t, ((0, 0), (0, 0), (0, 0), (0, 0), (1, 1)))
    # t2[l, o, j, n, m, k] = t_padded[l, o, j, n, m + k]
    t2 = jnp.stack([tp[..., k:k + W] for k in range(3)], axis=-1)
    t3 = jnp.einsum('lojnmk,jki->lonmi', t2, weight,
                    precision=jax.lax.Precision.HIGHEST)
    t4 = jnp.transpose(t3, (0, 2, 3, 1, 4)).reshape(N, H, W, G * Cg)
    t4 = jnp.roll(t4, shift, axis=1)
    return jnp.transpose(t4, (0, 3, 1, 2))


if __name__ == "__main__":
    # Small shapes consistent with the module structure
    # (the module itself hard-codes N=128, G=2, Cg=128, H=W=28).
    N, G, Cg, H, W = 2, 2, 64, 8, 8
    C = G * Cg
    shift = 1  # TODO(synk): torch module draws shift_direction from {+1,-1} at random.

    key = jax.random.PRNGKey(0)
    kx, kw = jax.random.split(key)
    x = jax.random.normal(kx, (N, C, H, W), dtype=jnp.float32)
    w = jax.random.normal(kw, (Cg, 3, Cg), dtype=jnp.float32)

    # f32 compute path: structural check against the reference for both signs.
    for s in (1, -1):
        f32_fn = jax.jit(functools.partial(
            grouped_shift_conv, groups=G, shift=s, compute_dtype=jnp.float32))
        y32 = jax.block_until_ready(f32_fn(x, w))
        y_ref = reference(x, w, groups=G, shift=s)
        assert y32.shape == (N, C, H, W)
        assert jnp.allclose(y32, y_ref, atol=5e-2, rtol=2e-2), (
            "f32 mismatch", s, float(jnp.max(jnp.abs(y32 - y_ref))))

    # bf16 fast path (default): compare against the reference evaluated on
    # bf16-rounded inputs (tolerance covers accumulation-order differences).
    bf16_fn = jax.jit(functools.partial(grouped_shift_conv, groups=G, shift=shift))
    y = jax.block_until_ready(bf16_fn(x, w))
    xr = x.astype(jnp.bfloat16).astype(jnp.float32)
    wr = w.astype(jnp.bfloat16).astype(jnp.float32)
    y_ref_bf = reference(xr, wr, groups=G, shift=shift)
    assert y.shape == (N, C, H, W)
    assert jnp.allclose(y, y_ref_bf, atol=2e-1, rtol=5e-2), (
        "bf16 mismatch", float(jnp.max(jnp.abs(y - y_ref_bf))))

    print("KERNEL_OK")
</pallas_src>

<mosaic_0001>
module attributes {stable_mosaic.version = 11 : i64} {
  func.func @_grouped_shift_conv_kernel(%arg0: i32, %arg1: i32, %arg2: memref<2x64x64xf32, #tpu.memory_space<vmem>>, %arg3: memref<3x64x64xf32, #tpu.memory_space<vmem>>, %arg4: memref<2x64x64xf32, #tpu.memory_space<vmem>>) attributes {dimension_semantics = [#tpu.dimension_semantics<parallel>, #tpu.dimension_semantics<parallel>], iteration_bounds = array<i64: 1, 2>, scalar_prefetch = 0 : i64, scratch_operands = 0 : i64, tpu.core_type = #tpu.core_type<tc>, window_params = [{transform_indices = @transform_0, window_bounds = array<i64: 2, 64, 64>}, {pipeline_mode = #tpu.pipeline_mode<synchronous>, transform_indices = @transform_1, window_bounds = array<i64: 3, 64, 64>}, {transform_indices = @transform_2, window_bounds = array<i64: 2, 64, 64>}]} {
    %0 = tpu.iota {dimensions = array<i32: 1>} : vector<1x64xi32>
    %c8_i32 = arith.constant 8 : i32
    %c0_i32 = arith.constant 0 : i32
    %1 = arith.cmpi eq, %c8_i32, %c0_i32 : i32
    %c1_i32 = arith.constant 1 : i32
    %2 = arith.select %1, %c1_i32, %c8_i32 : i32
    %3 = vector.broadcast %2 : i32 to vector<1x64xi32>
    %4 = arith.remsi %0, %3 : vector<1x64xi32>
    %c0_i32_0 = arith.constant 0 : i32
    %5 = vector.broadcast %c0_i32_0 : i32 to vector<1x64xi32>
    %6 = arith.cmpi ne, %4, %5 : vector<1x64xi32>
    %c0_i32_1 = arith.constant 0 : i32
    %7 = vector.broadcast %c0_i32_1 : i32 to vector<1x64xi32>
    %8 = arith.cmpi slt, %4, %7 : vector<1x64xi32>
    %c0_i32_2 = arith.constant 0 : i32
    %9 = arith.cmpi slt, %2, %c0_i32_2 : i32
    %10 = vector.broadcast %9 : i1 to vector<1x64xi1>
    %11 = vector.broadcast %10 : vector<1x64xi1> to vector<1x64xi1>
    %12 = arith.xori %8, %11 : vector<1x64xi1>
    %13 = arith.andi %12, %6 : vector<1x64xi1>
    %14 = vector.broadcast %2 : i32 to vector<1x64xi32>
    %15 = arith.addi %4, %14 : vector<1x64xi32>
    %16 = arith.select %13, %15, %4 : vector<1x64xi1>, vector<1x64xi32>
    %c0_i32_3 = arith.constant 0 : i32
    %17 = vector.broadcast %c0_i32_3 : i32 to vector<1x64xi32>
    %18 = arith.cmpi eq, %16, %17 : vector<1x64xi32>
    %c1_i32_4 = arith.constant 1 : i32
    %19 = vector.broadcast %c1_i32_4 : i32 to vector<1x64xi32>
    %20 = arith.cmpi sge, %16, %19 : vector<1x64xi32>
    %c6_i32 = arith.constant 6 : i32
    %21 = vector.broadcast %c6_i32 : i32 to vector<1x64xi32>
    %22 = arith.cmpi sle, %16, %21 : vector<1x64xi32>
    %c0 = arith.constant 0 : index
    %c0_5 = arith.constant 0 : index
    %c0_6 = arith.constant 0 : index
    %23 = vector.load %arg3[%c0, %c0_5, %c0_6] : memref<3x64x64xf32, #tpu.memory_space<vmem>>, vector<1x64x64xf32>
    %24 = vector.shape_cast %23 : vector<1x64x64xf32> to vector<64x64xf32>
    %c1 = arith.constant 1 : index
    %c0_7 = arith.constant 0 : index
    %c0_8 = arith.constant 0 : index
    %25 = vector.load %arg3[%c1, %c0_7, %c0_8] : memref<3x64x64xf32, #tpu.memory_space<vmem>>, vector<1x64x64xf32>
    %26 = vector.shape_cast %25 : vector<1x64x64xf32> to vector<64x64xf32>
    %c2 = arith.constant 2 : index
    %c0_9 = arith.constant 0 : index
    %c0_10 = arith.constant 0 : index
    %27 = vector.load %arg3[%c2, %c0_9, %c0_10] : memref<3x64x64xf32, #tpu.memory_space<vmem>>, vector<1x64x64xf32>
    %28 = vector.shape_cast %27 : vector<1x64x64xf32> to vector<64x64xf32>
    %c0_11 = arith.constant 0 : index
    %c0_12 = arith.constant 0 : index
    %c0_13 = arith.constant 0 : index
    %29 = vector.load %arg2[%c0_11, %c0_12, %c0_13] : memref<2x64x64xf32, #tpu.memory_space<vmem>>, vector<1x64x64xf32>
    %30 = vector.shape_cast %29 : vector<1x64x64xf32> to vector<64x64xf32>
    %31 = vector.extract_strided_slice %30 {offsets = [0, 63], sizes = [64, 1], strides = [1, 1]} : vector<64x64xf32> to vector<64x1xf32>
    %32 = vector.extract_strided_slice %30 {offsets = [0, 0], sizes = [64, 63], strides = [1, 1]} : vector<64x64xf32> to vector<64x63xf32>
    %33 = tpu.concatenate %31, %32 in 1 : vector<64x1xf32>, vector<64x63xf32> -> vector<64x64xf32>
    %34 = vector.extract_strided_slice %30 {offsets = [0, 55], sizes = [64, 9], strides = [1, 1]} : vector<64x64xf32> to vector<64x9xf32>
    %35 = vector.extract_strided_slice %30 {offsets = [0, 0], sizes = [64, 55], strides = [1, 1]} : vector<64x64xf32> to vector<64x55xf32>
    %36 = tpu.concatenate %34, %35 in 1 : vector<64x9xf32>, vector<64x55xf32> -> vector<64x64xf32>
    %37 = vector.shape_cast %18 : vector<1x64xi1> to vector<1x64xi1>
    %38 = vector.broadcast %37 : vector<1x64xi1> to vector<64x64xi1>
    %39 = arith.select %38, %33, %36 : vector<64x64xi1>, vector<64x64xf32>
    %40 = vector.extract_strided_slice %39 {offsets = [0, 63], sizes = [64, 1], strides = [1, 1]} : vector<64x64xf32> to vector<64x1xf32>
    %41 = vector.extract_strided_slice %39 {offsets = [0, 0], sizes = [64, 63], strides = [1, 1]} : vector<64x64xf32> to vector<64x63xf32>
    %42 = tpu.concatenate %40, %41 in 1 : vector<64x1xf32>, vector<64x63xf32> -> vector<64x64xf32>
    %cst = arith.constant 0.000000e+00 : f32
    %43 = vector.shape_cast %20 : vector<1x64xi1> to vector<1x64xi1>
    %44 = vector.broadcast %43 : vector<1x64xi1> to vector<64x64xi1>
    %45 = vector.broadcast %cst : f32 to vector<64x64xf32>
    %46 = arith.select %44, %42, %45 : vector<64x64xi1>, vector<64x64xf32>
    %47 = vector.extract_strided_slice %39 {offsets = [0, 1], sizes = [64, 63], strides = [1, 1]} : vector<64x64xf32> to vector<64x63xf32>
    %48 = vector.extract_strided_slice %39 {offsets = [0, 0], sizes = [64, 1], strides = [1, 1]} : vector<64x64xf32> to vector<64x1xf32>
    %49 = tpu.concatenate %47, %48 in 1 : vector<64x63xf32>, vector<64x1xf32> -> vector<64x64xf32>
    %cst_14 = arith.constant 0.000000e+00 : f32
    %50 = vector.shape_cast %22 : vector<1x64xi1> to vector<1x64xi1>
    %51 = vector.broadcast %50 : vector<1x64xi1> to vector<64x64xi1>
    %52 = vector.broadcast %cst_14 : f32 to vector<64x64xf32>
    %53 = arith.select %51, %49, %52 : vector<64x64xi1>, vector<64x64xf32>
    %cst_15 = arith.constant dense<0.000000e+00> : vector<64x64xf32>
    %54 = tpu.matmul %26, %39, %cst_15 {dimension_numbers = #tpu.dot_dimension_numbers<[1], [0], [0], [1], [0, 0, 1, 1], [], []>} : vector<64x64xf32>, vector<64x64xf32>, vector<64x64xf32> -> vector<64x64xf32>
    %cst_16 = arith.constant dense<0.000000e+00> : vector<64x64xf32>
    %55 = tpu.matmul %24, %46, %cst_16 {dimension_numbers = #tpu.dot_dimension_numbers<[1], [0], [0], [1], [0, 0, 1, 1], [], []>} : vector<64x64xf32>, vector<64x64xf32>, vector<64x64xf32> -> vector<64x64xf32>
    %56 = arith.addf %54, %55 : vector<64x64xf32>
    %cst_17 = arith.constant dense<0.000000e+00> : vector<64x64xf32>
    %57 = tpu.matmul %28, %53, %cst_17 {dimension_numbers = #tpu.dot_dimension_numbers<[1], [0], [0], [1], [0, 0, 1, 1], [], []>} : vector<64x64xf32>, vector<64x64xf32>, vector<64x64xf32> -> vector<64x64xf32>
    %58 = arith.addf %56, %57 : vector<64x64xf32>
    %c0_18 = arith.constant 0 : index
    %c0_19 = arith.constant 0 : index
    %c0_20 = arith.constant 0 : index
    %59 = vector.load %arg4[%c0_18, %c0_19, %c0_20] : memref<2x64x64xf32, #tpu.memory_space<vmem>>, vector<1x64x64xf32>
    %60 = vector.shape_cast %59 : vector<1x64x64xf32> to vector<64x64xf32>
    %61 = vector.shape_cast %58 : vector<64x64xf32> to vector<1x64x64xf32>
    tpu.vector_store %arg4[%c0_18, %c0_19, %c0_20], %61 {strides = array<i32>} : memref<2x64x64xf32, #tpu.memory_space<vmem>>, vector<1x64x64xf32>,
    %c1_21 = arith.constant 1 : index
    %c0_22 = arith.constant 0 : index
    %c0_23 = arith.constant 0 : index
    %62 = vector.load %arg2[%c1_21, %c0_22, %c0_23] : memref<2x64x64xf32, #tpu.memory_space<vmem>>, vector<1x64x64xf32>
    %63 = vector.shape_cast %62 : vector<1x64x64xf32> to vector<64x64xf32>
    %64 = vector.extract_strided_slice %63 {offsets = [0, 63], sizes = [64, 1], strides = [1, 1]} : vector<64x64xf32> to vector<64x1xf32>
    %65 = vector.extract_strided_slice %63 {offsets = [0, 0], sizes = [64, 63], strides = [1, 1]} : vector<64x64xf32> to vector<64x63xf32>
    %66 = tpu.concatenate %64, %65 in 1 : vector<64x1xf32>, vector<64x63xf32> -> vector<64x64xf32>
    %67 = vector.extract_strided_slice %63 {offsets = [0, 55], sizes = [64, 9], strides = [1, 1]} : vector<64x64xf32> to vector<64x9xf32>
    %68 = vector.extract_strided_slice %63 {offsets = [0, 0], sizes = [64, 55], strides = [1, 1]} : vector<64x64xf32> to vector<64x55xf32>
    %69 = tpu.concatenate %67, %68 in 1 : vector<64x9xf32>, vector<64x55xf32> -> vector<64x64xf32>
    %70 = vector.shape_cast %18 : vector<1x64xi1> to vector<1x64xi1>
    %71 = vector.broadcast %70 : vector<1x64xi1> to vector<64x64xi1>
    %72 = arith.select %71, %66, %69 : vector<64x64xi1>, vector<64x64xf32>
    %73 = vector.extract_strided_slice %72 {offsets = [0, 63], sizes = [64, 1], strides = [1, 1]} : vector<64x64xf32> to vector<64x1xf32>
    %74 = vector.extract_strided_slice %72 {offsets = [0, 0], sizes = [64, 63], strides = [1, 1]} : vector<64x64xf32> to vector<64x63xf32>
    %75 = tpu.concatenate %73, %74 in 1 : vector<64x1xf32>, vector<64x63xf32> -> vector<64x64xf32>
    %cst_24 = arith.constant 0.000000e+00 : f32
    %76 = vector.shape_cast %20 : vector<1x64xi1> to vector<1x64xi1>
    %77 = vector.broadcast %76 : vector<1x64xi1> to vector<64x64xi1>
    %78 = vector.broadcast %cst_24 : f32 to vector<64x64xf32>
    %79 = arith.select %77, %75, %78 : vector<64x64xi1>, vector<64x64xf32>
    %80 = vector.extract_strided_slice %72 {offsets = [0, 1], sizes = [64, 63], strides = [1, 1]} : vector<64x64xf32> to vector<64x63xf32>
    %81 = vector.extract_strided_slice %72 {offsets = [0, 0], sizes = [64, 1], strides = [1, 1]} : vector<64x64xf32> to vector<64x1xf32>
    %82 = tpu.concatenate %80, %81 in 1 : vector<64x63xf32>, vector<64x1xf32> -> vector<64x64xf32>
    %cst_25 = arith.constant 0.000000e+00 : f32
    %83 = vector.shape_cast %22 : vector<1x64xi1> to vector<1x64xi1>
    %84 = vector.broadcast %83 : vector<1x64xi1> to vector<64x64xi1>
    %85 = vector.broadcast %cst_25 : f32 to vector<64x64xf32>
    %86 = arith.select %84, %82, %85 : vector<64x64xi1>, vector<64x64xf32>
    %cst_26 = arith.constant dense<0.000000e+00> : vector<64x64xf32>
    %87 = tpu.matmul %26, %72, %cst_26 {dimension_numbers = #tpu.dot_dimension_numbers<[1], [0], [0], [1], [0, 0, 1, 1], [], []>} : vector<64x64xf32>, vector<64x64xf32>, vector<64x64xf32> -> vector<64x64xf32>
    %cst_27 = arith.constant dense<0.000000e+00> : vector<64x64xf32>
    %88 = tpu.matmul %24, %79, %cst_27 {dimension_numbers = #tpu.dot_dimension_numbers<[1], [0], [0], [1], [0, 0, 1, 1], [], []>} : vector<64x64xf32>, vector<64x64xf32>, vector<64x64xf32> -> vector<64x64xf32>
    %89 = arith.addf %87, %88 : vector<64x64xf32>
    %cst_28 = arith.constant dense<0.000000e+00> : vector<64x64xf32>
    %90 = tpu.matmul %28, %86, %cst_28 {dimension_numbers = #tpu.dot_dimension_numbers<[1], [0], [0], [1], [0, 0, 1, 1], [], []>} : vector<64x64xf32>, vector<64x64xf32>, vector<64x64xf32> -> vector<64x64xf32>
    %91 = arith.addf %89, %90 : vector<64x64xf32>
    %c1_29 = arith.constant 1 : index
    %c0_30 = arith.constant 0 : index
    %c0_31 = arith.constant 0 : index
    %92 = vector.load %arg4[%c1_29, %c0_30, %c0_31] : memref<2x64x64xf32, #tpu.memory_space<vmem>>, vector<1x64x64xf32>
    %93 = vector.shape_cast %92 : vector<1x64x64xf32> to vector<64x64xf32>
    %94 = vector.shape_cast %91 : vector<64x64xf32> to vector<1x64x64xf32>
    tpu.vector_store %arg4[%c1_29, %c0_30, %c0_31], %94 {strides = array<i32>} : memref<2x64x64xf32, #tpu.memory_space<vmem>>, vector<1x64x64xf32>,
    return
  }
  func.func @transform_0(%arg0: i32, %arg1: i32) -> (i32, i32, i32) {
    %c0_i32 = arith.constant 0 : i32
    %c0_i32_0 = arith.constant 0 : i32
    return %arg0, %arg1, %c0_i32 : i32, i32, i32
  }
  func.func @transform_1(%arg0: i32, %arg1: i32) -> (i32, i32, i32) {
    %c0_i32 = arith.constant 0 : i32
    %c0_i32_0 = arith.constant 0 : i32
    %c0_i32_1 = arith.constant 0 : i32
    %c0_i32_2 = arith.constant 0 : i32
    return %c0_i32, %c0_i32_0, %c0_i32_1 : i32, i32, i32
  }
  func.func @transform_2(%arg0: i32, %arg1: i32) -> (i32, i32, i32) {
    %c0_i32 = arith.constant 0 : i32
    %c0_i32_0 = arith.constant 0 : i32
    return %arg0, %arg1, %c0_i32 : i32, i32, i32
  }
}

</mosaic_0001>

<llo_original>
// kernel: grouped_shift_conv.1
$region0: #{grouped_shift_conv.1}
  #allocation0 [shape = 'u32[]', space=smem, size = 0x4, offset = 0x4, fixed_abs, tag = 'smem constant byte address 0x4 - core index']
  #allocation1 [shape = 'u32[72,128]{1,0:T(1,128)}', space=vmem, size = 0x9000, scoped, tag = 'internal scratch']
  %s0 = inlined_call_operand.vmem [shape: f32[2,128,64], index: 0, kind: input, shape index: {}]
  %s1 = inlined_call_operand.vmem [shape: f32[3,64,64], index: 1, kind: input, shape index: {}]
  %s2 = inlined_call_operand.vmem [shape: f32[2,128,64], index: 2, kind: output, shape index: {}]
  %s3 = sld [smem:[#allocation0]]
  $region113: #{grouped_shift_conv.1} parent=0
    _
  %s5 = ssub.s32 1, %s3
  %s6 = scalar_select 0, %s5, %s3
  $region1: #{grouped_shift_conv.1} parent=0
    #allocation2 [shape = 'u8[131072]{0}', space=vmem, size = 0x20000, scoped, tag = 'input window, operand 0']
    #allocation3 [shape = 'u8[131072]{0}', space=vmem, size = 0x20000, scoped, tag = 'output window, operand 0']
    loop: start=0, step=1, limit=4
    $region2: #{grouped_shift_conv.1} parent=1 // loop_pre_header
      _
    $region3: #{grouped_shift_conv.1} parent=1 // loop_header
      %s8 = sphi 0, %s12
      %p9 = scmp.ge.s32.totalorder %s8, 4
      %s15 = sphi 0, %s27
      %s16 = sphi 0, %s23
      %s17 = sphi 0, %s15
      %s18 = sphi 0, %s16
      %s19 = sphi 0, %s17
      %s20 = sphi 0, %s18
      %s32 = sphi 0, %s34
      %s35 = sphi 0, %s32
      %s36 = sphi 0, %s35
      %s52 = sphi 0, %s36
      %s56 = sphi 0, %s56
      %s58 = sphi 0, %s56
      %s59 = sphi 0, %s58
      %s73 = sphi 0, %s59
      %s81 = sphi 0, %s83
      %s84 = sphi 0, %s81
      %s85 = sphi 0, %s84
      %s101 = sphi 0, %s85
    $region4: #{grouped_shift_conv.1} parent=1 // loop_header_branch
      %11 = sbr.rel (%p9) target = $region8
    $region5: #{grouped_shift_conv.1} parent=1 // loop_body
      %s13 = ssub.s32 %s8, 1
      %s14 = ssub.s32 %s8, 2
      %s21 = sadd.s32 1, %s16
      %p22 = scmp.ge.s32.totalorder %s21, 2
      %s23 = scalar_select %p22, 0, %s21
      %s24 = sadd.s32 1, %s15
      %s25 = scalar_select %p22, %s24, %s15
      %p26 = scmp.ge.s32.totalorder %s25, 1
      %s27 = scalar_select %p26, 0, %s25
      %s28 = ssub.s32 %s15, %s27
      %s29 = ssub.s32 %s16, %s23
      %s30 = sor.u32 %s28, %s29
      %p31 = scmp.eq.s32.totalorder %s30, 0
      %s33 = sadd.s32 %s32, 1
      %s34 = scalar_select %p31, %s32, %s33
      %p37 = pneg %p31
      %p38 = scmp.eq.s32.totalorder %s8, 1
      %p39 = por %p37, %p38
      %p40 = scmp.ne.s32.totalorder %s32, %s35
      %p41 = scmp.eq.s32.totalorder %s8, 0
      %p42 = por %p40, %p41
      %p43 = scmp.ne.s32.totalorder %s32, %s35
      %p44 = scmp.eq.s32.totalorder %s13, 1
      %p45 = por %p43, %p44
      %p46 = scmp.ne.s32.totalorder %s35, %s36
      %p47 = scmp.eq.s32.totalorder %s13, 0
      %p48 = por %p46, %p47
      %p49 = scmp.ne.s32.totalorder %s35, %s36
      %p50 = scmp.eq.s32.totalorder %s14, 1
      %p51 = por %p49, %p50
      %p53 = scmp.ne.s32.totalorder %s36, %s52
      %p54 = scmp.eq.s32.totalorder %s14, 0
      %p55 = por %p53, %p54
      %s57 = sadd.s32 %s56, 1
      %p60 = scmp.eq.s32.totalorder %s8, 1
      %p61 = scmp.ne.s32.totalorder %s56, %s58
      %p62 = scmp.eq.s32.totalorder %s8, 0
      %p63 = por %p61, %p62
      %p64 = scmp.ne.s32.totalorder %s56, %s58
      %p65 = scmp.eq.s32.totalorder %s13, 1
      %p66 = por %p64, %p65
      %p67 = scmp.ne.s32.totalorder %s58, %s59
      %p68 = scmp.eq.s32.totalorder %s13, 0
      %p69 = por %p67, %p68
      %p70 = scmp.ne.s32.totalorder %s58, %s59
      %p71 = scmp.eq.s32.totalorder %s14, 1
      %p72 = por %p70, %p71
      %p74 = scmp.ne.s32.totalorder %s59, %s73
      %p75 = scmp.eq.s32.totalorder %s14, 0
      %p76 = por %p74, %p75
      %s77 = ssub.s32 %s15, %s27
      %s78 = ssub.s32 %s16, %s23
      %s79 = sor.u32 %s77, %s78
      %p80 = scmp.eq.s32.totalorder %s79, 0
      %s82 = sadd.s32 %s81, 1
      %s83 = scalar_select %p80, %s81, %s82
      %p86 = pneg %p80
      %p87 = scmp.eq.s32.totalorder %s8, 1
      %p88 = por %p86, %p87
      %p89 = scmp.ne.s32.totalorder %s81, %s84
      %p90 = scmp.eq.s32.totalorder %s8, 0
      %p91 = por %p89, %p90
      %p92 = scmp.ne.s32.totalorder %s81, %s84
      %p93 = scmp.eq.s32.totalorder %s13, 1
      %p94 = por %p92, %p93
      %p95 = scmp.ne.s32.totalorder %s84, %s85
      %p96 = scmp.eq.s32.totalorder %s13, 0
      %p97 = por %p95, %p96
      %p98 = scmp.ne.s32.totalorder %s84, %s85
      %p99 = scmp.eq.s32.totalorder %s14, 1
      %p100 = por %p98, %p99
      %p102 = scmp.ne.s32.totalorder %s85, %s101
      %p103 = scmp.eq.s32.totalorder %s14, 0
      %p104 = por %p102, %p103
      %p105 = scmp.le.s32.totalorder 1, %s8
      %p106 = scmp.lt.s32.totalorder %s8, 3
      %p107 = pnand %p105, %p106
      %p108 = pneg %p107
      // Predicated region
      $region9: #{grouped_shift_conv.1} parent=5 // pred_check
        _
      $region10: #{grouped_shift_conv.1} parent=5 // pred_check_branch
        %110 = sbr.rel (%p107) target = $region12
      $region11: #{grouped_shift_conv.1} parent=5 // pred_region
        %s111 = ssub.s32 %s8, 1
        // Predicated region
        $region13: #{grouped_shift_conv.1} parent=11 // pred_check
          %p112 = pneg %p69
        $region14: #{grouped_shift_conv.1} parent=11 // pred_check_branch
          %114 = sbr.rel (%p112) target = $region16
        $region15: #{grouped_shift_conv.1} parent=11 // pred_region
          _
        $region16: #{grouped_shift_conv.1} parent=11 // pred_fallthru
          _
      $region12: #{grouped_shift_conv.1} parent=5 // pred_fallthru
        _
      %p115 = scmp.lt.s32.totalorder %s8, 2
      // Predicated region
      $region17: #{grouped_shift_conv.1} parent=5 // pred_check
        %p116 = pneg %p115
      $region18: #{grouped_shift_conv.1} parent=5 // pred_check_branch
        %118 = sbr.rel (%p116) target = $region20
      $region19: #{grouped_shift_conv.1} parent=5 // pred_region
        // Predicated region
        $region21: #{grouped_shift_conv.1} parent=19 // pred_check
          %p119 = pneg %p42
        $region22: #{grouped_shift_conv.1} parent=19 // pred_check_branch
          %121 = sbr.rel (%p119) target = $region24
        $region23: #{grouped_shift_conv.1} parent=19 // pred_region
          %s122 = sand.u32 %s32, 1
          %s123 = sand.u32 %s32, 1
          %s124 = smul.addr %s123, 128
          %s125 = scalar_lea.vmem [#allocation2], %s124
          %s126 = smul.u32 2, %s15
          %s127 = smul.u32 8, %s16
          %s128 = smul.addr %s126, 16
          %s129 = sadd.s32 %s127, %s128
          %s130 = smul.addr %s129, 8
          %s131 = scalar_lea.vmem %s0, %s130
          // Predicated region
          $region25: #{grouped_shift_conv.1} parent=23 // pred_check
            _
          $region26: #{grouped_shift_conv.1} parent=23 // pred_check_branch
            %133 = sbr.rel (0) target = $region28
          $region27: #{grouped_shift_conv.1} parent=23 // pred_region
            // Predicated region
            $region29: #{grouped_shift_conv.1} parent=27 // pred_check
              _
            $region30: #{grouped_shift_conv.1} parent=27 // pred_check_branch
              %135 = sbr.rel (0) target = $region32
            $region31: #{grouped_shift_conv.1} parent=27 // pred_region
              // Predicated region
              $region44: #{grouped_shift_conv.1} parent=31 // pred_check
                _
              $region45: #{grouped_shift_conv.1} parent=31 // pred_check_branch
                %181 = sbr.rel (0) target = $region47
              $region46: #{grouped_shift_conv.1} parent=31 // pred_region
                loop: start=0, step=1, limit=1
                $region48: #{grouped_shift_conv.1} parent=46 // loop_pre_header
                  _
                $region49: #{grouped_shift_conv.1} parent=46 // loop_header
                  %s183 = sphi 0, %s187
                  %p184 = scmp.ge.s32.totalorder %s183, 1
                  %s188 = sphi %s131, %s131
                  %s189 = sphi %s125, %s125
                $region50: #{grouped_shift_conv.1} parent=46 // loop_header_branch
                  %186 = sbr.rel (%p184) target = $region54
                $region51: #{grouped_shift_conv.1} parent=46 // loop_body
                  %v190 = vld [vmem:[%s188] sm:$0xff]
                  %191 = vst [vmem:[%s189] sm:$0xff] %v190
                  %v192 = vld [vmem:[%s188 + $0x8] sm:$0xff]
                  %193 = vst [vmem:[%s189 + $0x8] sm:$0xff] %v192
                  %v194 = vld [vmem:[%s188 + $0x10] sm:$0xff]
                  %195 = vst [vmem:[%s189 + $0x10] sm:$0xff] %v194
                  %v196 = vld [vmem:[%s188 + $0x18] sm:$0xff]
                  %197 = vst [vmem:[%s189 + $0x18] sm:$0xff] %v196
                  %v198 = vld [vmem:[%s188 + $0x20] sm:$0xff]
                  %199 = vst [vmem:[%s189 + $0x20] sm:$0xff] %v198
                  %v200 = vld [vmem:[%s188 + $0x28] sm:$0xff]
                  %201 = vst [vmem:[%s189 + $0x28] sm:$0xff] %v200
                  %v202 = vld [vmem:[%s188 + $0x30] sm:$0xff]
                  %203 = vst [vmem:[%s189 + $0x30] sm:$0xff] %v202
                  %v204 = vld [vmem:[%s188 + $0x38] sm:$0xff]
                  %205 = vst [vmem:[%s189 + $0x38] sm:$0xff] %v204
                  %v206 = vld [vmem:[%s188 + $0x80] sm:$0xff]
                  %207 = vst [vmem:[%s189 + $0x40] sm:$0xff] %v206
                  %v208 = vld [vmem:[%s188 + $0x88] sm:$0xff]
                  %209 = vst [vmem:[%s189 + $0x48] sm:$0xff] %v208
                  %v210 = vld [vmem:[%s188 + $0x90] sm:$0xff]
                  %211 = vst [vmem:[%s189 + $0x50] sm:$0xff] %v210
                  %v212 = vld [vmem:[%s188 + $0x98] sm:$0xff]
                  %213 = vst [vmem:[%s189 + $0x58] sm:$0xff] %v212
                  %v214 = vld [vmem:[%s188 + $0xa0] sm:$0xff]
                  %215 = vst [vmem:[%s189 + $0x60] sm:$0xff] %v214
                  %v216 = vld [vmem:[%s188 + $0xa8] sm:$0xff]
                  %217 = vst [vmem:[%s189 + $0x68] sm:$0xff] %v216
                  %v218 = vld [vmem:[%s188 + $0xb0] sm:$0xff]
                  %219 = vst [vmem:[%s189 + $0x70] sm:$0xff] %v218
                  %v220 = vld [vmem:[%s188 + $0xb8] sm:$0xff]
                  %221 = vst [vmem:[%s189 + $0x78] sm:$0xff] %v220
                $region52: #{grouped_shift_conv.1} parent=46 // loop_footer
                  %s187 = sadd.s32 1, %s183
                $region53: #{grouped_shift_conv.1} parent=46 // loop_footer_branch
                  %182 = sbr.rel target = $region49
                $region54: #{grouped_shift_conv.1} parent=46 // loop_exit
                  _
              $region47: #{grouped_shift_conv.1} parent=31 // pred_fallthru
                _
              // Predicated region
              $region55: #{grouped_shift_conv.1} parent=31 // pred_check
                _
              $region56: #{grouped_shift_conv.1} parent=31 // pred_check_branch
                %223 = sbr.rel target = $region58
              $region57: #{grouped_shift_conv.1} parent=31 // pred_region
                _
              $region58: #{grouped_shift_conv.1} parent=31 // pred_fallthru
                _
            $region32: #{grouped_shift_conv.1} parent=27 // pred_fallthru
              _
            // Predicated region
            $region33: #{grouped_shift_conv.1} parent=27 // pred_check
              _
            $region34: #{grouped_shift_conv.1} parent=27 // pred_check_branch
              %137 = sbr.rel target = $region36
            $region35: #{grouped_shift_conv.1} parent=27 // pred_region
              %s139 = ssub.s32 256, 1
              loop: start=0, step=1, limit=1
              $region37: #{grouped_shift_conv.1} parent=35 // loop_pre_header
                _
              $region38: #{grouped_shift_conv.1} parent=35 // loop_header
                %s141 = sphi 0, %s145
                %p142 = scmp.ge.s32.totalorder %s141, 1
                %s146 = sphi %s131, %s131
                %s147 = sphi %s125, %s125
              $region39: #{grouped_shift_conv.1} parent=35 // loop_header_branch
                %144 = sbr.rel (%p142) target = $region43
              $region40: #{grouped_shift_conv.1} parent=35 // loop_body
                %v148 = vld [vmem:[%s146] sm:%s139]
                %149 = vst [vmem:[%s147] sm:%s139] %v148
                %v150 = vld [vmem:[%s146 + $0x8] sm:%s139]
                %151 = vst [vmem:[%s147 + $0x8] sm:%s139] %v150
                %v152 = vld [vmem:[%s146 + $0x10] sm:%s139]
                %153 = vst [vmem:[%s147 + $0x10] sm:%s139] %v152
                %v154 = vld [vmem:[%s146 + $0x18] sm:%s139]
                %155 = vst [vmem:[%s147 + $0x18] sm:%s139] %v154
                %v156 = vld [vmem:[%s146 + $0x20] sm:%s139]
                %157 = vst [vmem:[%s147 + $0x20] sm:%s139] %v156
                %v158 = vld [vmem:[%s146 + $0x28] sm:%s139]
                %159 = vst [vmem:[%s147 + $0x28] sm:%s139] %v158
                %v160 = vld [vmem:[%s146 + $0x30] sm:%s139]
                %161 = vst [vmem:[%s147 + $0x30] sm:%s139] %v160
                %v162 = vld [vmem:[%s146 + $0x38] sm:%s139]
                %163 = vst [vmem:[%s147 + $0x38] sm:%s139] %v162
                %v164 = vld [vmem:[%s146 + $0x80] sm:%s139]
                %165 = vst [vmem:[%s147 + $0x40] sm:%s139] %v164
                %v166 = vld [vmem:[%s146 + $0x88] sm:%s139]
                %167 = vst [vmem:[%s147 + $0x48] sm:%s139] %v166
                %v168 = vld [vmem:[%s146 + $0x90] sm:%s139]
                %169 = vst [vmem:[%s147 + $0x50] sm:%s139] %v168
                %v170 = vld [vmem:[%s146 + $0x98] sm:%s139]
                %171 = vst [vmem:[%s147 + $0x58] sm:%s139] %v170
                %v172 = vld [vmem:[%s146 + $0xa0] sm:%s139]
                %173 = vst [vmem:[%s147 + $0x60] sm:%s139] %v172
                %v174 = vld [vmem:[%s146 + $0xa8] sm:%s139]
                %175 = vst [vmem:[%s147 + $0x68] sm:%s139] %v174
                %v176 = vld [vmem:[%s146 + $0xb0] sm:%s139]
                %177 = vst [vmem:[%s147 + $0x70] sm:%s139] %v176
                %v178 = vld [vmem:[%s146 + $0xb8] sm:%s139]
                %179 = vst [vmem:[%s147 + $0x78] sm:%s139] %v178
              $region41: #{grouped_shift_conv.1} parent=35 // loop_footer
                %s145 = sadd.s32 1, %s141
              $region42: #{grouped_shift_conv.1} parent=35 // loop_footer_branch
                %140 = sbr.rel target = $region38
              $region43: #{grouped_shift_conv.1} parent=35 // loop_exit
                _
            $region36: #{grouped_shift_conv.1} parent=27 // pred_fallthru
              _
          $region28: #{grouped_shift_conv.1} parent=23 // pred_fallthru
            _
          %224 = vnop
        $region24: #{grouped_shift_conv.1} parent=19 // pred_fallthru
          _
      $region20: #{grouped_shift_conv.1} parent=5 // pred_fallthru
        _
      %p225 = scmp.le.s32.totalorder 1, %s8
      %p226 = scmp.lt.s32.totalorder %s8, 3
      %p227 = pnand %p225, %p226
      %p228 = pneg %p227
      // Predicated region
      $region59: #{grouped_shift_conv.1} parent=5 // pred_check
        _
      $region60: #{grouped_shift_conv.1} parent=5 // pred_check_branch
        %230 = sbr.rel (%p227) target = $region62
      $region61: #{grouped_shift_conv.1} parent=5 // pred_region
        %s231 = ssub.s32 %s8, 1
        %s232 = sand.u32 %s35, 1
        %s233 = sand.u32 %s35, 1
        %s234 = smul.addr %s233, 128
        %s235 = scalar_lea.vmem [#allocation2], %s234
        // Predicated region
        $region63: #{grouped_shift_conv.1} parent=61 // pred_check
          %p236 = pneg %p48
        $region64: #{grouped_shift_conv.1} parent=61 // pred_check_branch
          %238 = sbr.rel (%p236) target = $region66
        $region65: #{grouped_shift_conv.1} parent=61 // pred_region
          _
        $region66: #{grouped_shift_conv.1} parent=61 // pred_fallthru
          _
        %s239 = sand.u32 %s35, 1
        %s240 = sand.u32 %s35, 1
        %s241 = smul.addr %s240, 128
        %s242 = scalar_lea.vmem [#allocation2], %s241
        %p243 = pneg %p48
        %p244 = pneg %p45
        %p245 = pneg %p69
        %p246 = pneg %p66
        %p247 = pneg %p97
        %p248 = pneg %p94
        %s249 = sand.u32 %s84, 1
        %s250 = sand.u32 %s84, 1
        %s251 = smul.addr %s250, 128
        %s252 = scalar_lea.vmem [#allocation3], %s251
        %s253 = smul.u32 2, %s17
        %s254 = smul.u32 8, %s18
        %s255 = smul.u32 2, %s17
        %s256 = smul.u32 8, %s18
        %v257 = vlaneseq
        %v258 = vand.u32 %v257, 127
        %vm259 = vcmp.lt.s32.totalorder %v258, 0
        %v260 = vsub.s32 0, %v258
        %v261 = vsel %vm259, %v260, %v258
        %v262 = vshrl.u32 %v261, 3
        %v263 = vand.u32 %v261, 7
        %v264 = vsub.s32 0, %v263
        %v265 = vsel %vm259, %v264, %v263
        %vm266 = vcmp.ne.s32.totalorder %v265, 0
        %vm267 = vcmp.lt.s32.totalorder %v265, 0
        %vm268 = vmand %vm267, %vm266
        %v269 = vadd.s32 %v265, 8
        %v270 = vsel %vm268, %v269, %v265
        %vm271 = vcmp.eq.s32.totalorder %v270, 0
        %vm272 = vcmp.ge.s32.totalorder %v270, 1
        %vm273 = vcmp.le.s32.totalorder %v270, 6
        %v274 = vld [vmem:[%s1] sm:$0xff]
        %v275 = vld [vmem:[%s1 + $0x8] sm:$0xff]
        %v276 = vld [vmem:[%s1 + $0x10] sm:$0xff]
        %v277 = vld [vmem:[%s1 + $0x18] sm:$0xff]
        %v278 = vld [vmem:[%s1 + $0x20] sm:$0xff]
        %v279 = vld [vmem:[%s1 + $0x28] sm:$0xff]
        %v280 = vld [vmem:[%s1 + $0x30] sm:$0xff]
        %v281 = vld [vmem:[%s1 + $0x38] sm:$0xff]
        %s282 = scalar_lea.vmem %s1, 64
        %v283 = vld [vmem:[%s282] sm:$0xff]
        %v284 = vld [vmem:[%s282 + $0x8] sm:$0xff]
        %v285 = vld [vmem:[%s282 + $0x10] sm:$0xff]
        %v286 = vld [vmem:[%s282 + $0x18] sm:$0xff]
        %v287 = vld [vmem:[%s282 + $0x20] sm:$0xff]
        %v288 = vld [vmem:[%s282 + $0x28] sm:$0xff]
        %v289 = vld [vmem:[%s282 + $0x30] sm:$0xff]
        %v290 = vld [vmem:[%s282 + $0x38] sm:$0xff]
        %s291 = scalar_lea.vmem %s1, 128
        %v292 = vld [vmem:[%s291] sm:$0xff]
        %v293 = vld [vmem:[%s291 + $0x8] sm:$0xff]
        %v294 = vld [vmem:[%s291 + $0x10] sm:$0xff]
        %v295 = vld [vmem:[%s291 + $0x18] sm:$0xff]
        %v296 = vld [vmem:[%s291 + $0x20] sm:$0xff]
        %v297 = vld [vmem:[%s291 + $0x28] sm:$0xff]
        %v298 = vld [vmem:[%s291 + $0x30] sm:$0xff]
        %v299 = vld [vmem:[%s291 + $0x38] sm:$0xff]
        %v300 = vld [vmem:[%s235] sm:$0xff]
        %v301 = vld [vmem:[%s235 + $0x8] sm:$0xff]
        %v302 = vld [vmem:[%s235 + $0x10] sm:$0xff]
        %v303 = vld [vmem:[%s235 + $0x18] sm:$0xff]
        %v304 = vld [vmem:[%s235 + $0x20] sm:$0xff]
        %v305 = vld [vmem:[%s235 + $0x28] sm:$0xff]
        %v306 = vld [vmem:[%s235 + $0x30] sm:$0xff]
        %v307 = vld [vmem:[%s235 + $0x38] sm:$0xff]
        %316 = vrot.lane.b32.xlu0 %v300, 65
        %v317 = vpop.permute.xlu0 %316
        %318 = vrot.lane.b32.xlu0 %v301, 65
        %v319 = vpop.permute.xlu0 %318
        %320 = vrot.lane.b32.xlu0 %v302, 65
        %v321 = vpop.permute.xlu0 %320
        %322 = vrot.lane.b32.xlu0 %v303, 65
        %v323 = vpop.permute.xlu0 %322
        %324 = vrot.lane.b32.xlu0 %v304, 65
        %v325 = vpop.permute.xlu0 %324
        %326 = vrot.lane.b32.xlu0 %v305, 65
        %v327 = vpop.permute.xlu0 %326
        %328 = vrot.lane.b32.xlu0 %v306, 65
        %v329 = vpop.permute.xlu0 %328
        %330 = vrot.lane.b32.xlu0 %v307, 65
        %v331 = vpop.permute.xlu0 %330
        %340 = vrot.lane.b32.xlu0 %v300, 1
        %v341 = vpop.permute.xlu0 %340
        %342 = vrot.lane.b32.xlu0 %v301, 1
        %v343 = vpop.permute.xlu0 %342
        %344 = vrot.lane.b32.xlu0 %v302, 1
        %v345 = vpop.permute.xlu0 %344
        %346 = vrot.lane.b32.xlu0 %v303, 1
        %v347 = vpop.permute.xlu0 %346
        %348 = vrot.lane.b32.xlu0 %v304, 1
        %v349 = vpop.permute.xlu0 %348
        %350 = vrot.lane.b32.xlu0 %v305, 1
        %v351 = vpop.permute.xlu0 %350
        %352 = vrot.lane.b32.xlu0 %v306, 1
        %v353 = vpop.permute.xlu0 %352
        %354 = vrot.lane.b32.xlu0 %v307, 1
        %v355 = vpop.permute.xlu0 %354
        %vm364 = vcmask 7168
        %v365 = vsel %vm364, %v317, %v341
        %v366 = vsel %vm364, %v319, %v343
        %v367 = vsel %vm364, %v321, %v345
        %v368 = vsel %vm364, %v323, %v347
        %v369 = vsel %vm364, %v325, %v349
        %v370 = vsel %vm364, %v327, %v351
        %v371 = vsel %vm364, %v329, %v353
        %v372 = vsel %vm364, %v331, %v355
        %373 = vrot.lane.b32.xlu0 %v300, 73
        %v374 = vpop.permute.xlu0 %373
        %375 = vrot.lane.b32.xlu0 %v301, 73
        %v376 = vpop.permute.xlu0 %375
        %377 = vrot.lane.b32.xlu0 %v302, 73
        %v378 = vpop.permute.xlu0 %377
        %379 = vrot.lane.b32.xlu0 %v303, 73
        %v380 = vpop.permute.xlu0 %379
        %381 = vrot.lane.b32.xlu0 %v304, 73
        %v382 = vpop.permute.xlu0 %381
        %383 = vrot.lane.b32.xlu0 %v305, 73
        %v384 = vpop.permute.xlu0 %383
        %385 = vrot.lane.b32.xlu0 %v306, 73
        %v386 = vpop.permute.xlu0 %385
        %387 = vrot.lane.b32.xlu0 %v307, 73
        %v388 = vpop.permute.xlu0 %387
        %397 = vrot.lane.b32.xlu0 %v300, 9
        %v398 = vpop.permute.xlu0 %397
        %399 = vrot.lane.b32.xlu0 %v301, 9
        %v400 = vpop.permute.xlu0 %399
        %401 = vrot.lane.b32.xlu0 %v302, 9
        %v402 = vpop.permute.xlu0 %401
        %403 = vrot.lane.b32.xlu0 %v303, 9
        %v404 = vpop.permute.xlu0 %403
        %405 = vrot.lane.b32.xlu0 %v304, 9
        %v406 = vpop.permute.xlu0 %405
        %407 = vrot.lane.b32.xlu0 %v305, 9
        %v408 = vpop.permute.xlu0 %407
        %409 = vrot.lane.b32.xlu0 %v306, 9
        %v410 = vpop.permute.xlu0 %409
        %411 = vrot.lane.b32.xlu0 %v307, 9
        %v412 = vpop.permute.xlu0 %411
        %vm421 = vcmask 72704
        %v422 = vsel %vm421, %v374, %v398
        %v423 = vsel %vm421, %v376, %v400
        %v424 = vsel %vm421, %v378, %v402
        %v425 = vsel %vm421, %v380, %v404
        %v426 = vsel %vm421, %v382, %v406
        %v427 = vsel %vm421, %v384, %v408
        %v428 = vsel %vm421, %v386, %v410
        %v429 = vsel %vm421, %v388, %v412
        %v430 = vsel %vm271, 1, 0
        %vm431 = vcmp.eq.s32.totalorder %v430, 1
        %v432 = vsel %vm431, %v365, %v422
        %v433 = vsel %vm431, %v366, %v423
        %v434 = vsel %vm431, %v367, %v424
        %v435 = vsel %vm431, %v368, %v425
        %v436 = vsel %vm431, %v369, %v426
        %v437 = vsel %vm431, %v370, %v427
        %v438 = vsel %vm431, %v371, %v428
        %v439 = vsel %vm431, %v372, %v429
        %448 = vrot.lane.b32.xlu0 %v432, 65
        %v449 = vpop.permute.xlu0 %448
        %450 = vrot.lane.b32.xlu0 %v433, 65
        %v451 = vpop.permute.xlu0 %450
        %452 = vrot.lane.b32.xlu0 %v434, 65
        %v453 = vpop.permute.xlu0 %452
        %454 = vrot.lane.b32.xlu0 %v435, 65
        %v455 = vpop.permute.xlu0 %454
        %456 = vrot.lane.b32.xlu0 %v436, 65
        %v457 = vpop.permute.xlu0 %456
        %458 = vrot.lane.b32.xlu0 %v437, 65
        %v459 = vpop.permute.xlu0 %458
        %460 = vrot.lane.b32.xlu0 %v438, 65
        %v461 = vpop.permute.xlu0 %460
        %462 = vrot.lane.b32.xlu0 %v439, 65
        %v463 = vpop.permute.xlu0 %462
        %472 = vrot.lane.b32.xlu0 %v432, 1
        %v473 = vpop.permute.xlu0 %472
        %474 = vrot.lane.b32.xlu0 %v433, 1
        %v475 = vpop.permute.xlu0 %474
        %476 = vrot.lane.b32.xlu0 %v434, 1
        %v477 = vpop.permute.xlu0 %476
        %478 = vrot.lane.b32.xlu0 %v435, 1
        %v479 = vpop.permute.xlu0 %478
        %480 = vrot.lane.b32.xlu0 %v436, 1
        %v481 = vpop.permute.xlu0 %480
        %482 = vrot.lane.b32.xlu0 %v437, 1
        %v483 = vpop.permute.xlu0 %482
        %484 = vrot.lane.b32.xlu0 %v438, 1
        %v485 = vpop.permute.xlu0 %484
        %486 = vrot.lane.b32.xlu0 %v439, 1
        %v487 = vpop.permute.xlu0 %486
        %v496 = vsel %vm364, %v449, %v473
        %v497 = vsel %vm364, %v451, %v475
        %v498 = vsel %vm364, %v453, %v477
        %v499 = vsel %vm364, %v455, %v479
        %v500 = vsel %vm364, %v457, %v481
        %v501 = vsel %vm364, %v459, %v483
        %v502 = vsel %vm364, %v461, %v485
        %v503 = vsel %vm364, %v463, %v487
        %v504 = vsel %vm272, 1, 0
        %vm505 = vcmp.eq.s32.totalorder %v504, 1
        %v506 = vsel %vm505, %v496, 0.0
        %v507 = vsel %vm505, %v497, 0.0
        %v508 = vsel %vm505, %v498, 0.0
        %v509 = vsel %vm505, %v499, 0.0
        %v510 = vsel %vm505, %v500, 0.0
        %v511 = vsel %vm505, %v501, 0.0
        %v512 = vsel %vm505, %v502, 0.0
        %v513 = vsel %vm505, %v503, 0.0
        %514 = vrot.lane.b32.xlu0 %v432, 127
        %v515 = vpop.permute.xlu0 %514
        %516 = vrot.lane.b32.xlu0 %v433, 127
        %v517 = vpop.permute.xlu0 %516
        %518 = vrot.lane.b32.xlu0 %v434, 127
        %v519 = vpop.permute.xlu0 %518
        %520 = vrot.lane.b32.xlu0 %v435, 127
        %v521 = vpop.permute.xlu0 %520
        %522 = vrot.lane.b32.xlu0 %v436, 127
        %v523 = vpop.permute.xlu0 %522
        %524 = vrot.lane.b32.xlu0 %v437, 127
        %v525 = vpop.permute.xlu0 %524
        %526 = vrot.lane.b32.xlu0 %v438, 127
        %v527 = vpop.permute.xlu0 %526
        %528 = vrot.lane.b32.xlu0 %v439, 127
        %v529 = vpop.permute.xlu0 %528
        %538 = vrot.lane.b32.xlu0 %v432, 63
        %v539 = vpop.permute.xlu0 %538
        %540 = vrot.lane.b32.xlu0 %v433, 63
        %v541 = vpop.permute.xlu0 %540
        %542 = vrot.lane.b32.xlu0 %v434, 63
        %v543 = vpop.permute.xlu0 %542
        %544 = vrot.lane.b32.xlu0 %v435, 63
        %v545 = vpop.permute.xlu0 %544
        %546 = vrot.lane.b32.xlu0 %v436, 63
        %v547 = vpop.permute.xlu0 %546
        %548 = vrot.lane.b32.xlu0 %v437, 63
        %v549 = vpop.permute.xlu0 %548
        %550 = vrot.lane.b32.xlu0 %v438, 63
        %v551 = vpop.permute.xlu0 %550
        %552 = vrot.lane.b32.xlu0 %v439, 63
        %v553 = vpop.permute.xlu0 %552
        %vm562 = vcmask 515072
        %v563 = vsel %vm562, %v515, %v539
        %v564 = vsel %vm562, %v517, %v541
        %v565 = vsel %vm562, %v519, %v543
        %v566 = vsel %vm562, %v521, %v545
        %v567 = vsel %vm562, %v523, %v547
        %v568 = vsel %vm562, %v525, %v549
        %v569 = vsel %vm562, %v527, %v551
        %v570 = vsel %vm562, %v529, %v553
        %v571 = vsel %vm273, 1, 0
        %vm572 = vcmp.eq.s32.totalorder %v571, 1
        %v573 = vsel %vm572, %v563, 0.0
        %v574 = vsel %vm572, %v564, 0.0
        %v575 = vsel %vm572, %v565, 0.0
        %v576 = vsel %vm572, %v566, 0.0
        %v577 = vsel %vm572, %v567, 0.0
        %v578 = vsel %vm572, %v568, 0.0
        %v579 = vsel %vm572, %v569, 0.0
        %v580 = vsel %vm572, %v570, 0.0
        %vm581 = vcmask 523264
        %v583 = vsel %vm581, %v274, 0
        %v586 = vsel %vm581, %v275, 0
        %v589 = vsel %vm581, %v276, 0
        %v592 = vsel %vm581, %v277, 0
        %v595 = vsel %vm581, %v278, 0
        %v598 = vsel %vm581, %v279, 0
        %v601 = vsel %vm581, %v280, 0
        %v604 = vsel %vm581, %v281, 0
        %606 = vmatpush.msra.mxu0 0.0
        %607 = vmatpush.msra.mxu0 0.0
        %608 = vmatpush.msra.mxu0 0.0
        %609 = vmatpush.msra.mxu0 0.0
        %610 = vmatpush.msra.mxu0 0.0
        %611 = vmatpush.msra.mxu0 0.0
        %612 = vmatpush.msra.mxu0 0.0
        %613 = vmatpush.msra.mxu0 0.0
        %614 = vmatpush.msra.mxu0 %v513
        %615 = vmatpush.msra.mxu0 %v512
        %616 = vmatpush.msra.mxu0 %v511
        %617 = vmatpush.msra.mxu0 %v510
        %618 = vmatpush.msra.mxu0 %v509
        %619 = vmatpush.msra.mxu0 %v508
        %620 = vmatpush.msra.mxu0 %v507
        %621 = vmatpush.msra.mxu0 %v506
        %622 = vmatmul.f32.gmra.mxu0 %v583
        %v623 = vpop.f32.mrf.mxu0
        %v624 = vadd.f32 0.0, %v623
        %625 = vmatmul.f32.gmra.mxu0 %v586
        %v626 = vpop.f32.mrf.mxu0
        %v627 = vadd.f32 0.0, %v626
        %628 = vmatmul.f32.gmra.mxu0 %v589
        %v629 = vpop.f32.mrf.mxu0
        %v630 = vadd.f32 0.0, %v629
        %631 = vmatmul.f32.gmra.mxu0 %v592
        %v632 = vpop.f32.mrf.mxu0
        %v633 = vadd.f32 0.0, %v632
        %634 = vmatmul.f32.gmra.mxu0 %v595
        %v635 = vpop.f32.mrf.mxu0
        %v636 = vadd.f32 0.0, %v635
        %637 = vmatmul.f32.gmra.mxu0 %v598
        %v638 = vpop.f32.mrf.mxu0
        %v639 = vadd.f32 0.0, %v638
        %640 = vmatmul.f32.gmra.mxu0 %v601
        %v641 = vpop.f32.mrf.mxu0
        %v642 = vadd.f32 0.0, %v641
        %643 = vmatmul.f32.gmra.mxu0 %v604
        %v644 = vpop.f32.mrf.mxu0
        %v645 = vadd.f32 0.0, %v644
        %646 = vdwg.mxu0
        %v648 = vsel %vm581, %v283, 0
        %v651 = vsel %vm581, %v284, 0
        %v654 = vsel %vm581, %v285, 0
        %v657 = vsel %vm581, %v286, 0
        %v660 = vsel %vm581, %v287, 0
        %v663 = vsel %vm581, %v288, 0
        %v666 = vsel %vm581, %v289, 0
        %v669 = vsel %vm581, %v290, 0
        %671 = vmatpush.msra.mxu0 0.0
        %672 = vmatpush.msra.mxu0 0.0
        %673 = vmatpush.msra.mxu0 0.0
        %674 = vmatpush.msra.mxu0 0.0
        %675 = vmatpush.msra.mxu0 0.0
        %676 = vmatpush.msra.mxu0 0.0
        %677 = vmatpush.msra.mxu0 0.0
        %678 = vmatpush.msra.mxu0 0.0
        %679 = vmatpush.msra.mxu0 %v439
        %680 = vmatpush.msra.mxu0 %v438
        %681 = vmatpush.msra.mxu0 %v437
        %682 = vmatpush.msra.mxu0 %v436
        %683 = vmatpush.msra.mxu0 %v435
        %684 = vmatpush.msra.mxu0 %v434
        %685 = vmatpush.msra.mxu0 %v433
        %686 = vmatpush.msra.mxu0 %v432
        %687 = vmatmul.f32.gmra.mxu0 %v648
        %v688 = vpop.f32.mrf.mxu0
        %v689 = vadd.f32 %v624, %v688
        %690 = vmatmul.f32.gmra.mxu0 %v651
        %v691 = vpop.f32.mrf.mxu0
        %v692 = vadd.f32 %v627, %v691
        %693 = vmatmul.f32.gmra.mxu0 %v654
        %v694 = vpop.f32.mrf.mxu0
        %v695 = vadd.f32 %v630, %v694
        %696 = vmatmul.f32.gmra.mxu0 %v657
        %v697 = vpop.f32.mrf.mxu0
        %v698 = vadd.f32 %v633, %v697
        %699 = vmatmul.f32.gmra.mxu0 %v660
        %v700 = vpop.f32.mrf.mxu0
        %v701 = vadd.f32 %v636, %v700
        %702 = vmatmul.f32.gmra.mxu0 %v663
        %v703 = vpop.f32.mrf.mxu0
        %v704 = vadd.f32 %v639, %v703
        %705 = vmatmul.f32.gmra.mxu0 %v666
        %v706 = vpop.f32.mrf.mxu0
        %v707 = vadd.f32 %v642, %v706
        %708 = vmatmul.f32.gmra.mxu0 %v669
        %v709 = vpop.f32.mrf.mxu0
        %v710 = vadd.f32 %v645, %v709
        %711 = vdwg.mxu0
        %v713 = vsel %vm581, %v292, 0
        %v716 = vsel %vm581, %v293, 0
        %v719 = vsel %vm581, %v294, 0
        %v722 = vsel %vm581, %v295, 0
        %v725 = vsel %vm581, %v296, 0
        %v728 = vsel %vm581, %v297, 0
        %v731 = vsel %vm581, %v298, 0
        %v734 = vsel %vm581, %v299, 0
        %736 = vmatpush.msra.mxu0 0.0
        %737 = vmatpush.msra.mxu0 0.0
        %738 = vmatpush.msra.mxu0 0.0
        %739 = vmatpush.msra.mxu0 0.0
        %740 = vmatpush.msra.mxu0 0.0
        %741 = vmatpush.msra.mxu0 0.0
        %742 = vmatpush.msra.mxu0 0.0
        %743 = vmatpush.msra.mxu0 0.0
        %744 = vmatpush.msra.mxu0 %v580
        %745 = vmatpush.msra.mxu0 %v579
        %746 = vmatpush.msra.mxu0 %v578
        %747 = vmatpush.msra.mxu0 %v577
        %748 = vmatpush.msra.mxu0 %v576
        %749 = vmatpush.msra.mxu0 %v575
        %750 = vmatpush.msra.mxu0 %v574
        %751 = vmatpush.msra.mxu0 %v573
        %752 = vmatmul.f32.gmra.mxu0 %v713
        %v753 = vpop.f32.mrf.mxu0
        %v754 = vadd.f32 0.0, %v753
        %755 = vmatmul.f32.gmra.mxu0 %v716
        %v756 = vpop.f32.mrf.mxu0
        %v757 = vadd.f32 0.0, %v756
        %758 = vmatmul.f32.gmra.mxu0 %v719
        %v759 = vpop.f32.mrf.mxu0
        %v760 = vadd.f32 0.0, %v759
        %761 = vmatmul.f32.gmra.mxu0 %v722
        %v762 = vpop.f32.mrf.mxu0
        %v763 = vadd.f32 0.0, %v762
        %764 = vmatmul.f32.gmra.mxu0 %v725
        %v765 = vpop.f32.mrf.mxu0
        %v766 = vadd.f32 0.0, %v765
        %767 = vmatmul.f32.gmra.mxu0 %v728
        %v768 = vpop.f32.mrf.mxu0
        %v769 = vadd.f32 0.0, %v768
        %770 = vmatmul.f32.gmra.mxu0 %v731
        %v771 = vpop.f32.mrf.mxu0
        %v772 = vadd.f32 0.0, %v771
        %773 = vmatmul.f32.gmra.mxu0 %v734
        %v774 = vpop.f32.mrf.mxu0
        %v775 = vadd.f32 0.0, %v774
        %776 = vdwg.mxu0
        %v777 = vadd.f32 %v689, %v754
        %v778 = vadd.f32 %v692, %v757
        %v779 = vadd.f32 %v695, %v760
        %v780 = vadd.f32 %v698, %v763
        %v781 = vadd.f32 %v701, %v766
        %v782 = vadd.f32 %v704, %v769
        %v783 = vadd.f32 %v707, %v772
        %v784 = vadd.f32 %v710, %v775
        %785 = vst.msk [vmem:[%s252] sm:$0xff] %vm581, %v777
        %786 = vst.msk [vmem:[%s252 + $0x8] sm:$0xff] %vm581, %v778
        %787 = vst.msk [vmem:[%s252 + $0x10] sm:$0xff] %vm581, %v779
        %788 = vst.msk [vmem:[%s252 + $0x18] sm:$0xff] %vm581, %v780
        %789 = vst.msk [vmem:[%s252 + $0x20] sm:$0xff] %vm581, %v781
        %790 = vst.msk [vmem:[%s252 + $0x28] sm:$0xff] %vm581, %v782
        %791 = vst.msk [vmem:[%s252 + $0x30] sm:$0xff] %vm581, %v783
        %792 = vst.msk [vmem:[%s252 + $0x38] sm:$0xff] %vm581, %v784
        %s793 = scalar_lea.vmem %s235, 64 [#allocation2]
        %v794 = vld [vmem:[%s793] sm:$0xff]
        %v795 = vld [vmem:[%s793 + $0x8] sm:$0xff]
        %v796 = vld [vmem:[%s793 + $0x10] sm:$0xff]
        %v797 = vld [vmem:[%s793 + $0x18] sm:$0xff]
        %v798 = vld [vmem:[%s793 + $0x20] sm:$0xff]
        %v799 = vld [vmem:[%s793 + $0x28] sm:$0xff]
        %v800 = vld [vmem:[%s793 + $0x30] sm:$0xff]
        %v801 = vld [vmem:[%s793 + $0x38] sm:$0xff]
        %810 = vrot.lane.b32.xlu0 %v794, 65
        %v811 = vpop.permute.xlu0 %810
        %812 = vrot.lane.b32.xlu0 %v795, 65
        %v813 = vpop.permute.xlu0 %812
        %814 = vrot.lane.b32.xlu0 %v796, 65
        %v815 = vpop.permute.xlu0 %814
        %816 = vrot.lane.b32.xlu0 %v797, 65
        %v817 = vpop.permute.xlu0 %816
        %818 = vrot.lane.b32.xlu0 %v798, 65
        %v819 = vpop.permute.xlu0 %818
        %820 = vrot.lane.b32.xlu0 %v799, 65
        %v821 = vpop.permute.xlu0 %820
        %822 = vrot.lane.b32.xlu0 %v800, 65
        %v823 = vpop.permute.xlu0 %822
        %824 = vrot.lane.b32.xlu0 %v801, 65
        %v825 = vpop.permute.xlu0 %824
        %834 = vrot.lane.b32.xlu0 %v794, 1
        %v835 = vpop.permute.xlu0 %834
        %836 = vrot.lane.b32.xlu0 %v795, 1
        %v837 = vpop.permute.xlu0 %836
        %838 = vrot.lane.b32.xlu0 %v796, 1
        %v839 = vpop.permute.xlu0 %838
        %840 = vrot.lane.b32.xlu0 %v797, 1
        %v841 = vpop.permute.xlu0 %840
        %842 = vrot.lane.b32.xlu0 %v798, 1
        %v843 = vpop.permute.xlu0 %842
        %844 = vrot.lane.b32.xlu0 %v799, 1
        %v845 = vpop.permute.xlu0 %844
        %846 = vrot.lane.b32.xlu0 %v800, 1
        %v847 = vpop.permute.xlu0 %846
        %848 = vrot.lane.b32.xlu0 %v801, 1
        %v849 = vpop.permute.xlu0 %848
        %v858 = vsel %vm364, %v811, %v835
        %v859 = vsel %vm364, %v813, %v837
        %v860 = vsel %vm364, %v815, %v839
        %v861 = vsel %vm364, %v817, %v841
        %v862 = vsel %vm364, %v819, %v843
        %v863 = vsel %vm364, %v821, %v845
        %v864 = vsel %vm364, %v823, %v847
        %v865 = vsel %vm364, %v825, %v849
        %866 = vrot.lane.b32.xlu0 %v794, 73
        %v867 = vpop.permute.xlu0 %866
        %868 = vrot.lane.b32.xlu0 %v795, 73
        %v869 = vpop.permute.xlu0 %868
        %870 = vrot.lane.b32.xlu0 %v796, 73
        %v871 = vpop.permute.xlu0 %870
        %872 = vrot.lane.b32.xlu0 %v797, 73
        %v873 = vpop.permute.xlu0 %872
        %874 = vrot.lane.b32.xlu0 %v798, 73
        %v875 = vpop.permute.xlu0 %874
        %876 = vrot.lane.b32.xlu0 %v799, 73
        %v877 = vpop.permute.xlu0 %876
        %878 = vrot.lane.b32.xlu0 %v800, 73
        %v879 = vpop.permute.xlu0 %878
        %880 = vrot.lane.b32.xlu0 %v801, 73
        %v881 = vpop.permute.xlu0 %880
        %890 = vrot.lane.b32.xlu0 %v794, 9
        %v891 = vpop.permute.xlu0 %890
        %892 = vrot.lane.b32.xlu0 %v795, 9
        %v893 = vpop.permute.xlu0 %892
        %894 = vrot.lane.b32.xlu0 %v796, 9
        %v895 = vpop.permute.xlu0 %894
        %896 = vrot.lane.b32.xlu0 %v797, 9
        %v897 = vpop.permute.xlu0 %896
        %898 = vrot.lane.b32.xlu0 %v798, 9
        %v899 = vpop.permute.xlu0 %898
        %900 = vrot.lane.b32.xlu0 %v799, 9
        %v901 = vpop.permute.xlu0 %900
        %902 = vrot.lane.b32.xlu0 %v800, 9
        %v903 = vpop.permute.xlu0 %902
        %904 = vrot.lane.b32.xlu0 %v801, 9
        %v905 = vpop.permute.xlu0 %904
        %v914 = vsel %vm421, %v867, %v891
        %v915 = vsel %vm421, %v869, %v893
        %v916 = vsel %vm421, %v871, %v895
        %v917 = vsel %vm421, %v873, %v897
        %v918 = vsel %vm421, %v875, %v899
        %v919 = vsel %vm421, %v877, %v901
        %v920 = vsel %vm421, %v879, %v903
        %v921 = vsel %vm421, %v881, %v905
        %v922 = vsel %vm431, %v858, %v914
        %v923 = vsel %vm431, %v859, %v915
        %v924 = vsel %vm431, %v860, %v916
        %v925 = vsel %vm431, %v861, %v917
        %v926 = vsel %vm431, %v862, %v918
        %v927 = vsel %vm431, %v863, %v919
        %v928 = vsel %vm431, %v864, %v920
        %v929 = vsel %vm431, %v865, %v921
        %938 = vrot.lane.b32.xlu0 %v922, 65
        %v939 = vpop.permute.xlu0 %938
        %940 = vrot.lane.b32.xlu0 %v923, 65
        %v941 = vpop.permute.xlu0 %940
        %942 = vrot.lane.b32.xlu0 %v924, 65
        %v943 = vpop.permute.xlu0 %942
        %944 = vrot.lane.b32.xlu0 %v925, 65
        %v945 = vpop.permute.xlu0 %944
        %946 = vrot.lane.b32.xlu0 %v926, 65
        %v947 = vpop.permute.xlu0 %946
        %948 = vrot.lane.b32.xlu0 %v927, 65
        %v949 = vpop.permute.xlu0 %948
        %950 = vrot.lane.b32.xlu0 %v928, 65
        %v951 = vpop.permute.xlu0 %950
        %952 = vrot.lane.b32.xlu0 %v929, 65
        %v953 = vpop.permute.xlu0 %952
        %962 = vrot.lane.b32.xlu0 %v922, 1
        %v963 = vpop.permute.xlu0 %962
        %964 = vrot.lane.b32.xlu0 %v923, 1
        %v965 = vpop.permute.xlu0 %964
        %966 = vrot.lane.b32.xlu0 %v924, 1
        %v967 = vpop.permute.xlu0 %966
        %968 = vrot.lane.b32.xlu0 %v925, 1
        %v969 = vpop.permute.xlu0 %968
        %970 = vrot.lane.b32.xlu0 %v926, 1
        %v971 = vpop.permute.xlu0 %970
        %972 = vrot.lane.b32.xlu0 %v927, 1
        %v973 = vpop.permute.xlu0 %972
        %974 = vrot.lane.b32.xlu0 %v928, 1
        %v975 = vpop.permute.xlu0 %974
        %976 = vrot.lane.b32.xlu0 %v929, 1
        %v977 = vpop.permute.xlu0 %976
        %v986 = vsel %vm364, %v939, %v963
        %v987 = vsel %vm364, %v941, %v965
        %v988 = vsel %vm364, %v943, %v967
        %v989 = vsel %vm364, %v945, %v969
        %v990 = vsel %vm364, %v947, %v971
        %v991 = vsel %vm364, %v949, %v973
        %v992 = vsel %vm364, %v951, %v975
        %v993 = vsel %vm364, %v953, %v977
        %v994 = vsel %vm505, %v986, 0.0
        %v995 = vsel %vm505, %v987, 0.0
        %v996 = vsel %vm505, %v988, 0.0
        %v997 = vsel %vm505, %v989, 0.0
        %v998 = vsel %vm505, %v990, 0.0
        %v999 = vsel %vm505, %v991, 0.0
        %v1000 = vsel %vm505, %v992, 0.0
        %v1001 = vsel %vm505, %v993, 0.0
        %1002 = vrot.lane.b32.xlu0 %v922, 127
        %v1003 = vpop.permute.xlu0 %1002
        %1004 = vrot.lane.b32.xlu0 %v923, 127
        %v1005 = vpop.permute.xlu0 %1004
        %1006 = vrot.lane.b32.xlu0 %v924, 127
        %v1007 = vpop.permute.xlu0 %1006
        %1008 = vrot.lane.b32.xlu0 %v925, 127
        %v1009 = vpop.permute.xlu0 %1008
        %1010 = vrot.lane.b32.xlu0 %v926, 127
        %v1011 = vpop.permute.xlu0 %1010
        %1012 = vrot.lane.b32.xlu0 %v927, 127
        %v1013 = vpop.permute.xlu0 %1012
        %1014 = vrot.lane.b32.xlu0 %v928, 127
        %v1015 = vpop.permute.xlu0 %1014
        %1016 = vrot.lane.b32.xlu0 %v929, 127
        %v1017 = vpop.permute.xlu0 %1016
        %1026 = vrot.lane.b32.xlu0 %v922, 63
        %v1027 = vpop.permute.xlu0 %1026
        %1028 = vrot.lane.b32.xlu0 %v923, 63
        %v1029 = vpop.permute.xlu0 %1028
        %1030 = vrot.lane.b32.xlu0 %v924, 63
        %v1031 = vpop.permute.xlu0 %1030
        %1032 = vrot.lane.b32.xlu0 %v925, 63
        %v1033 = vpop.permute.xlu0 %1032
        %1034 = vrot.lane.b32.xlu0 %v926, 63
        %v1035 = vpop.permute.xlu0 %1034
        %1036 = vrot.lane.b32.xlu0 %v927, 63
        %v1037 = vpop.permute.xlu0 %1036
        %1038 = vrot.lane.b32.xlu0 %v928, 63
        %v1039 = vpop.permute.xlu0 %1038
        %1040 = vrot.lane.b32.xlu0 %v929, 63
        %v1041 = vpop.permute.xlu0 %1040
        %v1050 = vsel %vm562, %v1003, %v1027
        %v1051 = vsel %vm562, %v1005, %v1029
        %v1052 = vsel %vm562, %v1007, %v1031
        %v1053 = vsel %vm562, %v1009, %v1033
        %v1054 = vsel %vm562, %v1011, %v1035
        %v1055 = vsel %vm562, %v1013, %v1037
        %v1056 = vsel %vm562, %v1015, %v1039
        %v1057 = vsel %vm562, %v1017, %v1041
        %v1058 = vsel %vm572, %v1050, 0.0
        %v1059 = vsel %vm572, %v1051, 0.0
        %v1060 = vsel %vm572, %v1052, 0.0
        %v1061 = vsel %vm572, %v1053, 0.0
        %v1062 = vsel %vm572, %v1054, 0.0
        %v1063 = vsel %vm572, %v1055, 0.0
        %v1064 = vsel %vm572, %v1056, 0.0
        %v1065 = vsel %vm572, %v1057, 0.0
        %1066 = vmatpush.msra.mxu0 0.0
        %1067 = vmatpush.msra.mxu0 0.0
        %1068 = vmatpush.msra.mxu0 0.0
        %1069 = vmatpush.msra.mxu0 0.0
        %1070 = vmatpush.msra.mxu0 0.0
        %1071 = vmatpush.msra.mxu0 0.0
        %1072 = vmatpush.msra.mxu0 0.0
        %1073 = vmatpush.msra.mxu0 0.0
        %1074 = vmatpush.msra.mxu0 %v1001
        %1075 = vmatpush.msra.mxu0 %v1000
        %1076 = vmatpush.msra.mxu0 %v999
        %1077 = vmatpush.msra.mxu0 %v998
        %1078 = vmatpush.msra.mxu0 %v997
        %1079 = vmatpush.msra.mxu0 %v996
        %1080 = vmatpush.msra.mxu0 %v995
        %1081 = vmatpush.msra.mxu0 %v994
        %1082 = vmatmul.f32.gmra.mxu0 %v583
        %v1083 = vpop.f32.mrf.mxu0
        %v1084 = vadd.f32 0.0, %v1083
        %1085 = vmatmul.f32.gmra.mxu0 %v586
        %v1086 = vpop.f32.mrf.mxu0
        %v1087 = vadd.f32 0.0, %v1086
        %1088 = vmatmul.f32.gmra.mxu0 %v589
        %v1089 = vpop.f32.mrf.mxu0
        %v1090 = vadd.f32 0.0, %v1089
        %1091 = vmatmul.f32.gmra.mxu0 %v592
        %v1092 = vpop.f32.mrf.mxu0
        %v1093 = vadd.f32 0.0, %v1092
        %1094 = vmatmul.f32.gmra.mxu0 %v595
        %v1095 = vpop.f32.mrf.mxu0
        %v1096 = vadd.f32 0.0, %v1095
        %1097 = vmatmul.f32.gmra.mxu0 %v598
        %v1098 = vpop.f32.mrf.mxu0
        %v1099 = vadd.f32 0.0, %v1098
        %1100 = vmatmul.f32.gmra.mxu0 %v601
        %v1101 = vpop.f32.mrf.mxu0
        %v1102 = vadd.f32 0.0, %v1101
        %1103 = vmatmul.f32.gmra.mxu0 %v604
        %v1104 = vpop.f32.mrf.mxu0
        %v1105 = vadd.f32 0.0, %v1104
        %1106 = vdwg.mxu0
        %1107 = vmatpush.msra.mxu0 0.0
        %1108 = vmatpush.msra.mxu0 0.0
        %1109 = vmatpush.msra.mxu0 0.0
        %1110 = vmatpush.msra.mxu0 0.0
        %1111 = vmatpush.msra.mxu0 0.0
        %1112 = vmatpush.msra.mxu0 0.0
        %1113 = vmatpush.msra.mxu0 0.0
        %1114 = vmatpush.msra.mxu0 0.0
        %1115 = vmatpush.msra.mxu0 %v929
        %1116 = vmatpush.msra.mxu0 %v928
        %1117 = vmatpush.msra.mxu0 %v927
        %1118 = vmatpush.msra.mxu0 %v926
        %1119 = vmatpush.msra.mxu0 %v925
        %1120 = vmatpush.msra.mxu0 %v924
        %1121 = vmatpush.msra.mxu0 %v923
        %1122 = vmatpush.msra.mxu0 %v922
        %1123 = vmatmul.f32.gmra.mxu0 %v648
        %v1124 = vpop.f32.mrf.mxu0
        %v1125 = vadd.f32 %v1084, %v1124
        %1126 = vmatmul.f32.gmra.mxu0 %v651
        %v1127 = vpop.f32.mrf.mxu0
        %v1128 = vadd.f32 %v1087, %v1127
        %1129 = vmatmul.f32.gmra.mxu0 %v654
        %v1130 = vpop.f32.mrf.mxu0
        %v1131 = vadd.f32 %v1090, %v1130
        %1132 = vmatmul.f32.gmra.mxu0 %v657
        %v1133 = vpop.f32.mrf.mxu0
        %v1134 = vadd.f32 %v1093, %v1133
        %1135 = vmatmul.f32.gmra.mxu0 %v660
        %v1136 = vpop.f32.mrf.mxu0
        %v1137 = vadd.f32 %v1096, %v1136
        %1138 = vmatmul.f32.gmra.mxu0 %v663
        %v1139 = vpop.f32.mrf.mxu0
        %v1140 = vadd.f32 %v1099, %v1139
        %1141 = vmatmul.f32.gmra.mxu0 %v666
        %v1142 = vpop.f32.mrf.mxu0
        %v1143 = vadd.f32 %v1102, %v1142
        %1144 = vmatmul.f32.gmra.mxu0 %v669
        %v1145 = vpop.f32.mrf.mxu0
        %v1146 = vadd.f32 %v1105, %v1145
        %1147 = vdwg.mxu0
        %1148 = vmatpush.msra.mxu0 0.0
        %1149 = vmatpush.msra.mxu0 0.0
        %1150 = vmatpush.msra.mxu0 0.0
        %1151 = vmatpush.msra.mxu0 0.0
        %1152 = vmatpush.msra.mxu0 0.0
        %1153 = vmatpush.msra.mxu0 0.0
        %1154 = vmatpush.msra.mxu0 0.0
        %1155 = vmatpush.msra.mxu0 0.0
        %1156 = vmatpush.msra.mxu0 %v1065
        %1157 = vmatpush.msra.mxu0 %v1064
        %1158 = vmatpush.msra.mxu0 %v1063
        %1159 = vmatpush.msra.mxu0 %v1062
        %1160 = vmatpush.msra.mxu0 %v1061
        %1161 = vmatpush.msra.mxu0 %v1060
        %1162 = vmatpush.msra.mxu0 %v1059
        %1163 = vmatpush.msra.mxu0 %v1058
        %1164 = vmatmul.f32.gmra.mxu0 %v713
        %v1165 = vpop.f32.mrf.mxu0
        %v1166 = vadd.f32 0.0, %v1165
        %1167 = vmatmul.f32.gmra.mxu0 %v716
        %v1168 = vpop.f32.mrf.mxu0
        %v1169 = vadd.f32 0.0, %v1168
        %1170 = vmatmul.f32.gmra.mxu0 %v719
        %v1171 = vpop.f32.mrf.mxu0
        %v1172 = vadd.f32 0.0, %v1171
        %1173 = vmatmul.f32.gmra.mxu0 %v722
        %v1174 = vpop.f32.mrf.mxu0
        %v1175 = vadd.f32 0.0, %v1174
        %1176 = vmatmul.f32.gmra.mxu0 %v725
        %v1177 = vpop.f32.mrf.mxu0
        %v1178 = vadd.f32 0.0, %v1177
        %1179 = vmatmul.f32.gmra.mxu0 %v728
        %v1180 = vpop.f32.mrf.mxu0
        %v1181 = vadd.f32 0.0, %v1180
        %1182 = vmatmul.f32.gmra.mxu0 %v731
        %v1183 = vpop.f32.mrf.mxu0
        %v1184 = vadd.f32 0.0, %v1183
        %1185 = vmatmul.f32.gmra.mxu0 %v734
        %v1186 = vpop.f32.mrf.mxu0
        %v1187 = vadd.f32 0.0, %v1186
        %1188 = vdwg.mxu0
        %v1189 = vadd.f32 %v1125, %v1166
        %v1190 = vadd.f32 %v1128, %v1169
        %v1191 = vadd.f32 %v1131, %v1172
        %v1192 = vadd.f32 %v1134, %v1175
        %v1193 = vadd.f32 %v1137, %v1178
        %v1194 = vadd.f32 %v1140, %v1181
        %v1195 = vadd.f32 %v1143, %v1184
        %v1196 = vadd.f32 %v1146, %v1187
        %s1197 = scalar_lea.vmem %s252, 64 [#allocation3]
        %1198 = vst.msk [vmem:[%s1197] sm:$0xff] %vm581, %v1189
        %1199 = vst.msk [vmem:[%s1197 + $0x8] sm:$0xff] %vm581, %v1190
        %1200 = vst.msk [vmem:[%s1197 + $0x10] sm:$0xff] %vm581, %v1191
        %1201 = vst.msk [vmem:[%s1197 + $0x18] sm:$0xff] %vm581, %v1192
        %1202 = vst.msk [vmem:[%s1197 + $0x20] sm:$0xff] %vm581, %v1193
        %1203 = vst.msk [vmem:[%s1197 + $0x28] sm:$0xff] %vm581, %v1194
        %1204 = vst.msk [vmem:[%s1197 + $0x30] sm:$0xff] %vm581, %v1195
        %1205 = vst.msk [vmem:[%s1197 + $0x38] sm:$0xff] %vm581, %v1196
        %s1206 = sand.u32 %s84, 1
        %s1207 = sand.u32 %s84, 1
        %s1208 = smul.addr %s1207, 128
        %s1209 = scalar_lea.vmem [#allocation3], %s1208
        // Predicated region
        $region67: #{grouped_shift_conv.1} parent=61 // pred_check
          %p1210 = pneg %p94
        $region68: #{grouped_shift_conv.1} parent=61 // pred_check_branch
          %1212 = sbr.rel (%p1210) target = $region70
        $region69: #{grouped_shift_conv.1} parent=61 // pred_region
          %s1213 = smul.u32 2, %s17
          %s1214 = smul.u32 8, %s18
          %s1215 = smul.addr %s1213, 16
          %s1216 = sadd.s32 %s1214, %s1215
          %s1217 = smul.addr %s1216, 8
          %s1218 = scalar_lea.vmem %s2, %s1217
          // Predicated region
          $region71: #{grouped_shift_conv.1} parent=69 // pred_check
            _
          $region72: #{grouped_shift_conv.1} parent=69 // pred_check_branch
            %1220 = sbr.rel (0) target = $region74
          $region73: #{grouped_shift_conv.1} parent=69 // pred_region
            // Predicated region
            $region75: #{grouped_shift_conv.1} parent=73 // pred_check
              _
            $region76: #{grouped_shift_conv.1} parent=73 // pred_check_branch
              %1222 = sbr.rel (0) target = $region78
            $region77: #{grouped_shift_conv.1} parent=73 // pred_region
              // Predicated region
              $region90: #{grouped_shift_conv.1} parent=77 // pred_check
                _
              $region91: #{grouped_shift_conv.1} parent=77 // pred_check_branch
                %1268 = sbr.rel (0) target = $region93
              $region92: #{grouped_shift_conv.1} parent=77 // pred_region
                loop: start=0, step=1, limit=1
                $region94: #{grouped_shift_conv.1} parent=92 // loop_pre_header
                  _
                $region95: #{grouped_shift_conv.1} parent=92 // loop_header
                  %s1270 = sphi 0, %s1274
                  %p1271 = scmp.ge.s32.totalorder %s1270, 1
                  %s1275 = sphi %s1209, %s1209
                  %s1276 = sphi %s1218, %s1218
                $region96: #{grouped_shift_conv.1} parent=92 // loop_header_branch
                  %1273 = sbr.rel (%p1271) target = $region100
                $region97: #{grouped_shift_conv.1} parent=92 // loop_body
                  %v1277 = vld [vmem:[%s1275] sm:$0xff]
                  %1278 = vst [vmem:[%s1276] sm:$0xff] %v1277
                  %v1279 = vld [vmem:[%s1275 + $0x8] sm:$0xff]
                  %1280 = vst [vmem:[%s1276 + $0x8] sm:$0xff] %v1279
                  %v1281 = vld [vmem:[%s1275 + $0x10] sm:$0xff]
                  %1282 = vst [vmem:[%s1276 + $0x10] sm:$0xff] %v1281
                  %v1283 = vld [vmem:[%s1275 + $0x18] sm:$0xff]
                  %1284 = vst [vmem:[%s1276 + $0x18] sm:$0xff] %v1283
                  %v1285 = vld [vmem:[%s1275 + $0x20] sm:$0xff]
                  %1286 = vst [vmem:[%s1276 + $0x20] sm:$0xff] %v1285
                  %v1287 = vld [vmem:[%s1275 + $0x28] sm:$0xff]
                  %1288 = vst [vmem:[%s1276 + $0x28] sm:$0xff] %v1287
                  %v1289 = vld [vmem:[%s1275 + $0x30] sm:$0xff]
                  %1290 = vst [vmem:[%s1276 + $0x30] sm:$0xff] %v1289
                  %v1291 = vld [vmem:[%s1275 + $0x38] sm:$0xff]
                  %1292 = vst [vmem:[%s1276 + $0x38] sm:$0xff] %v1291
                  %v1293 = vld [vmem:[%s1275 + $0x40] sm:$0xff]
                  %1294 = vst [vmem:[%s1276 + $0x80] sm:$0xff] %v1293
                  %v1295 = vld [vmem:[%s1275 + $0x48] sm:$0xff]
                  %1296 = vst [vmem:[%s1276 + $0x88] sm:$0xff] %v1295
                  %v1297 = vld [vmem:[%s1275 + $0x50] sm:$0xff]
                  %1298 = vst [vmem:[%s1276 + $0x90] sm:$0xff] %v1297
                  %v1299 = vld [vmem:[%s1275 + $0x58] sm:$0xff]
                  %1300 = vst [vmem:[%s1276 + $0x98] sm:$0xff] %v1299
                  %v1301 = vld [vmem:[%s1275 + $0x60] sm:$0xff]
                  %1302 = vst [vmem:[%s1276 + $0xa0] sm:$0xff] %v1301
                  %v1303 = vld [vmem:[%s1275 + $0x68] sm:$0xff]
                  %1304 = vst [vmem:[%s1276 + $0xa8] sm:$0xff] %v1303
                  %v1305 = vld [vmem:[%s1275 + $0x70] sm:$0xff]
                  %1306 = vst [vmem:[%s1276 + $0xb0] sm:$0xff] %v1305
                  %v1307 = vld [vmem:[%s1275 + $0x78] sm:$0xff]
                  %1308 = vst [vmem:[%s1276 + $0xb8] sm:$0xff] %v1307
                $region98: #{grouped_shift_conv.1} parent=92 // loop_footer
                  %s1274 = sadd.s32 1, %s1270
                $region99: #{grouped_shift_conv.1} parent=92 // loop_footer_branch
                  %1269 = sbr.rel target = $region95
                $region100: #{grouped_shift_conv.1} parent=92 // loop_exit
                  _
              $region93: #{grouped_shift_conv.1} parent=77 // pred_fallthru
                _
              // Predicated region
              $region101: #{grouped_shift_conv.1} parent=77 // pred_check
                _
              $region102: #{grouped_shift_conv.1} parent=77 // pred_check_branch
                %1310 = sbr.rel target = $region104
              $region103: #{grouped_shift_conv.1} parent=77 // pred_region
                _
              $region104: #{grouped_shift_conv.1} parent=77 // pred_fallthru
                _
            $region78: #{grouped_shift_conv.1} parent=73 // pred_fallthru
              _
            // Predicated region
            $region79: #{grouped_shift_conv.1} parent=73 // pred_check
              _
            $region80: #{grouped_shift_conv.1} parent=73 // pred_check_branch
              %1224 = sbr.rel target = $region82
            $region81: #{grouped_shift_conv.1} parent=73 // pred_region
              %s1226 = ssub.s32 256, 1
              loop: start=0, step=1, limit=1
              $region83: #{grouped_shift_conv.1} parent=81 // loop_pre_header
                _
              $region84: #{grouped_shift_conv.1} parent=81 // loop_header
                %s1228 = sphi 0, %s1232
                %p1229 = scmp.ge.s32.totalorder %s1228, 1
                %s1233 = sphi %s1209, %s1209
                %s1234 = sphi %s1218, %s1218
              $region85: #{grouped_shift_conv.1} parent=81 // loop_header_branch
                %1231 = sbr.rel (%p1229) target = $region89
              $region86: #{grouped_shift_conv.1} parent=81 // loop_body
                %v1235 = vld [vmem:[%s1233] sm:%s1226]
                %1236 = vst [vmem:[%s1234] sm:%s1226] %v1235
                %v1237 = vld [vmem:[%s1233 + $0x8] sm:%s1226]
                %1238 = vst [vmem:[%s1234 + $0x8] sm:%s1226] %v1237
                %v1239 = vld [vmem:[%s1233 + $0x10] sm:%s1226]
                %1240 = vst [vmem:[%s1234 + $0x10] sm:%s1226] %v1239
                %v1241 = vld [vmem:[%s1233 + $0x18] sm:%s1226]
                %1242 = vst [vmem:[%s1234 + $0x18] sm:%s1226] %v1241
                %v1243 = vld [vmem:[%s1233 + $0x20] sm:%s1226]
                %1244 = vst [vmem:[%s1234 + $0x20] sm:%s1226] %v1243
                %v1245 = vld [vmem:[%s1233 + $0x28] sm:%s1226]
                %1246 = vst [vmem:[%s1234 + $0x28] sm:%s1226] %v1245
                %v1247 = vld [vmem:[%s1233 + $0x30] sm:%s1226]
                %1248 = vst [vmem:[%s1234 + $0x30] sm:%s1226] %v1247
                %v1249 = vld [vmem:[%s1233 + $0x38] sm:%s1226]
                %1250 = vst [vmem:[%s1234 + $0x38] sm:%s1226] %v1249
                %v1251 = vld [vmem:[%s1233 + $0x40] sm:%s1226]
                %1252 = vst [vmem:[%s1234 + $0x80] sm:%s1226] %v1251
                %v1253 = vld [vmem:[%s1233 + $0x48] sm:%s1226]
                %1254 = vst [vmem:[%s1234 + $0x88] sm:%s1226] %v1253
                %v1255 = vld [vmem:[%s1233 + $0x50] sm:%s1226]
                %1256 = vst [vmem:[%s1234 + $0x90] sm:%s1226] %v1255
                %v1257 = vld [vmem:[%s1233 + $0x58] sm:%s1226]
                %1258 = vst [vmem:[%s1234 + $0x98] sm:%s1226] %v1257
                %v1259 = vld [vmem:[%s1233 + $0x60] sm:%s1226]
                %1260 = vst [vmem:[%s1234 + $0xa0] sm:%s1226] %v1259
                %v1261 = vld [vmem:[%s1233 + $0x68] sm:%s1226]
                %1262 = vst [vmem:[%s1234 + $0xa8] sm:%s1226] %v1261
                %v1263 = vld [vmem:[%s1233 + $0x70] sm:%s1226]
                %1264 = vst [vmem:[%s1234 + $0xb0] sm:%s1226] %v1263
                %v1265 = vld [vmem:[%s1233 + $0x78] sm:%s1226]
                %1266 = vst [vmem:[%s1234 + $0xb8] sm:%s1226] %v1265
              $region87: #{grouped_shift_conv.1} parent=81 // loop_footer
                %s1232 = sadd.s32 1, %s1228
              $region88: #{grouped_shift_conv.1} parent=81 // loop_footer_branch
                %1227 = sbr.rel target = $region84
              $region89: #{grouped_shift_conv.1} parent=81 // loop_exit
                _
            $region82: #{grouped_shift_conv.1} parent=73 // pred_fallthru
              _
          $region74: #{grouped_shift_conv.1} parent=69 // pred_fallthru
            _
          %1311 = vnop
        $region70: #{grouped_shift_conv.1} parent=61 // pred_fallthru
          _
      $region62: #{grouped_shift_conv.1} parent=5 // pred_fallthru
        _
      %p1312 = scmp.le.s32.totalorder 2, %s8
      // Predicated region
      $region105: #{grouped_shift_conv.1} parent=5 // pred_check
        %p1313 = pneg %p1312
      $region106: #{grouped_shift_conv.1} parent=5 // pred_check_branch
        %1315 = sbr.rel (%p1313) target = $region108
      $region107: #{grouped_shift_conv.1} parent=5 // pred_region
        %s1316 = ssub.s32 %s8, 2
        // Predicated region
        $region109: #{grouped_shift_conv.1} parent=107 // pred_check
          %p1317 = pneg %p100
        $region110: #{grouped_shift_conv.1} parent=107 // pred_check_branch
          %1319 = sbr.rel (%p1317) target = $region112
        $region111: #{grouped_shift_conv.1} parent=107 // pred_region
          %s1320 = sand.u32 %s85, 1
          %s1321 = sand.u32 %s85, 1
          %s1322 = smul.addr %s1321, 128
          %s1323 = scalar_lea.vmem [#allocation3], %s1322
        $region112: #{grouped_shift_conv.1} parent=107 // pred_fallthru
          _
      $region108: #{grouped_shift_conv.1} parent=5 // pred_fallthru
        _
    $region6: #{grouped_shift_conv.1} parent=1 // loop_footer
      %s12 = sadd.s32 1, %s8
    $region7: #{grouped_shift_conv.1} parent=1 // loop_footer_branch
      %7 = sbr.rel target = $region3
    $region8: #{grouped_shift_conv.1} parent=1 // loop_exit
      _

</llo_original>
